<compile_context>
chip_gen: v6e
topology: v6e:2x2x1
jax: 0.10.0
libtpu: 0.0.40
codegen_flags: <defaults>
</compile_context>

<pallas_src>
import functools

import jax
import jax.numpy as jnp
from jax.experimental import pallas as pl
from jax.experimental.pallas import tpu as pltpu

KERNEL_SIZES = (3, 4, 5)
NUM_FEAT_MAPS = 100                      # C in the PyTorch module
CPAD = 128                               # per-branch channels padded to a lane multiple
CS = CPAD * len(KERNEL_SIZES)            # 384 stacked channels
HIDDEN = 128
NUM_CLASSES = 16
CLS_PAD = 128                            # classifier lanes padded to 128
BN_EPS = 1e-5
MAXPAD = (max(KERNEL_SIZES) - 1) // 2    # 2
NTAPS = max(KERNEL_SIZES)                # 5
NEG_MASK = -1e30                         # large finite negative (bf16-safe, no NaNs)


def _round_up(n, m):
    return ((n + m - 1) // m) * m


# ----------------------------------------------------------------------------------- #
# Kernel                                                                               #
# ----------------------------------------------------------------------------------- #
def topic_cnn_kernel(tb, l, e,
                     x_ref, wst_ref, off_ref,
                     w1_ref, b1_ref, w2_ref, b2_ref,
                     out_ref):
    """One batch tile of the full forward pass (post embedding-gather)."""
    # x_ref: (tb, l + 4, e) bf16, already mask-multiplied and zero-padded on the seq axis.
    x = x_ref[...]

    # All three conv branches at once: 5 shifted (tb*l, e) @ (e, 384) bf16 matmuls against
    # the tap-stacked, BN-scale-folded weights; f32 accumulation on the MXU.
    acc = jnp.dot(x[:, 0:l, :].reshape(tb * l, e), wst_ref[0],
                  preferred_element_type=jnp.float32)
    for dt in range(1, NTAPS):
        win = x[:, dt:dt + l, :].reshape(tb * l, e)
        acc = acc + jnp.dot(win, wst_ref[dt], preferred_element_type=jnp.float32)

    # Folded (conv bias + BatchNorm2d) offset with the validity mask fused in additively:
    # invalid (row, lane) positions carry -1e30, so ReLU clamps them to 0 and they can
    # never win the global max-pool (one fewer VALU pass than a separate mask multiply).
    r = jnp.maximum(acc.reshape(tb, l, CS) + off_ref[...], 0.0)
    feat = jnp.max(r, axis=1)                                          # (tb, 384)

    # FC1 (+ folded BatchNorm1d) + ReLU, FC2 padded to 128 lane-dense output lanes.
    # bf16 inputs/weights keep the MXU on its fast path; accumulation stays f32.
    h = jnp.maximum(
        jnp.dot(feat.astype(jnp.bfloat16), w1_ref[...],
                preferred_element_type=jnp.float32) + b1_ref[...],
        0.0)
    out_ref[...] = (jnp.dot(h.astype(jnp.bfloat16), w2_ref[...],
                            preferred_element_type=jnp.float32) + b2_ref[...])


# ----------------------------------------------------------------------------------- #
# Tiling heuristics                                                                    #
# ----------------------------------------------------------------------------------- #
def _choose_tb(B, l_eff, e):
    """Batch-tile rows aimed at ~2048 matmul rows/step, VMEM-capped, >=2 grid steps."""
    # Per matmul row: f32 acc + post-ReLU tensor (2 * 384 * 4 B) plus the bf16 activation
    # window copies and the double-buffered x tile (~6 copies * e * 2 B).
    bytes_per_row = 2 * CS * 4 + 12 * e
    budget = 14 * 1024 * 1024          # leaves room for weights under the 28 MiB limit
    rows_cap = max(l_eff, budget // bytes_per_row)
    rows = min(2048, rows_cap)         # amortize ~0.35us/step overhead, wide DMAs
    tb = max(8, (rows // l_eff) // 8 * 8)
    # Keep at least 2 grid steps (v7x dual TensorCore) whenever the batch allows it.
    tb = min(tb, _round_up(max(-(-B // 2), 8), 8))
    return tb


def _vmem_estimate(tb, l_eff, lp, e):
    rows = tb * l_eff
    x_bytes = 2 * tb * lp * e * 2                       # double-buffered activation tile
    work = rows * (2 * CS * 4 + 3 * e * 2)              # acc / relu + live tap windows
    const = 2 * (NTAPS * e * CS * 2 + l_eff * CS * 4 +
                 CS * HIDDEN * 2 + HIDDEN * CLS_PAD * 2 + HIDDEN * 4 + CLS_PAD * 4)
    out_b = 2 * tb * CLS_PAD * 4
    return x_bytes + work + const + out_b


# ----------------------------------------------------------------------------------- #
# Wrapper                                                                              #
# ----------------------------------------------------------------------------------- #
def topic_class_cnn_forward(tokens, masks, packed, *, tb=None):
    B, L = tokens.shape
    emb = packed["embedding"]                            # (V, E) bf16
    E = emb.shape[1]

    L_eff = _round_up(L, 16)             # keep the in-kernel reshapes sublane-tile aligned
    Lp = L_eff + 2 * MAXPAD

    # Embedding gather fused with the mask multiply, all in bf16 (mask is 0/1 so this is
    # bit-identical to masking in f32 then casting, at half the intermediate HBM bytes).
    x = jnp.take(emb, tokens, axis=0) * masks.astype(emb.dtype)[:, :, None]
    x = jnp.pad(x, ((0, 0), (MAXPAD, Lp - L - MAXPAD), (0, 0)))

    if tb is None:
        tb = _choose_tb(B, L_eff, E)
    tb = max(8, _round_up(tb, 8))
    Bp = _round_up(B, tb)
    if Bp != B:
        x = jnp.pad(x, ((0, Bp - B), (0, 0), (0, 0)))

    # Folded conv-bias+BN offset with the validity mask fused in: rows >= L (sequence
    # rounding) and the k=4 branch's missing last row get -1e30; valid rows get the
    # per-channel offset.  ReLU then zeroes the invalid entries before the max-pool.
    lane = jnp.arange(CS)
    is_k4 = (lane >= CPAD) & (lane < 2 * CPAD)
    row_limit = jnp.where(is_k4, L - 1, L)                            # (CS,)
    valid = jnp.arange(L_eff)[:, None] < row_limit[None, :]           # (L_eff, CS)
    off = jnp.where(valid, packed["off_stack"],
                    jnp.float32(NEG_MASK))[None]                      # (1, L_eff, CS)

    def full_spec(shape):
        zeros = (0,) * len(shape)
        return pl.BlockSpec(shape, lambda b, _z=zeros: _z)

    # Only raise the scoped-VMEM limit when the tile actually needs it (v5e default is
    # 16 MiB); 28 MiB stays inside v7x's 32 MiB scoped budget.
    est = _vmem_estimate(tb, L_eff, Lp, E)
    vmem_limit = 28 * 1024 * 1024 if est > 12 * 1024 * 1024 else None

    kernel = functools.partial(topic_cnn_kernel, tb, L_eff, E)
    out = pl.pallas_call(
        kernel,
        out_shape=jax.ShapeDtypeStruct((Bp, CLS_PAD), jnp.float32),
        grid=(Bp // tb,),
        in_specs=[
            pl.BlockSpec((tb, Lp, E), lambda b: (b, 0, 0)),   # activations, tiled on batch
            full_spec((NTAPS, E, CS)),                        # stacked conv weights (bf16)
            full_spec((1, L_eff, CS)),                        # offsets + additive mask
            full_spec((CS, HIDDEN)),                          # FC1 (BN1d folded, bf16)
            full_spec((1, HIDDEN)),
            full_spec((HIDDEN, CLS_PAD)),                     # FC2 (lane-padded, bf16)
            full_spec((1, CLS_PAD)),
        ],
        out_specs=pl.BlockSpec((tb, CLS_PAD), lambda b: (b, 0)),
        compiler_params=pltpu.CompilerParams(
            dimension_semantics=("parallel",),
            vmem_limit_bytes=vmem_limit),
    )(x, packed["w_stack"], off,
      packed["w1"], packed["b1"], packed["w2"], packed["b2"])

    return out[:B, :NUM_CLASSES]


# ----------------------------------------------------------------------------------- #
# Parameters: raw (PyTorch-like) init + packing (BN fold, channel pad, branch stack)   #
# ----------------------------------------------------------------------------------- #
def init_raw_params(key, vocab_size, emb_size):
    keys = iter(jax.random.split(key, 64))
    nk = lambda: next(keys)
    C = NUM_FEAT_MAPS
    raw = {"conv_w": {}, "conv_b": {}, "conv_bn": {}}
    raw["embedding"] = jax.random.normal(nk(), (vocab_size, emb_size), jnp.float32)
    for k in KERNEL_SIZES:
        raw["conv_w"][k] = 0.1 * jax.random.normal(nk(), (k, emb_size, C), jnp.float32)
        raw["conv_b"][k] = 0.1 * jax.random.normal(nk(), (C,), jnp.float32)
        raw["conv_bn"][k] = {
            "gamma": 1.0 + 0.1 * jax.random.normal(nk(), (C,), jnp.float32),
            "beta": 0.1 * jax.random.normal(nk(), (C,), jnp.float32),
            "mean": 0.1 * jax.random.normal(nk(), (C,), jnp.float32),
            "var": jax.random.uniform(nk(), (C,), jnp.float32, 0.5, 1.5),
        }
    in1 = C * len(KERNEL_SIZES)
    raw["fc1_w"] = 0.05 * jax.random.normal(nk(), (in1, HIDDEN), jnp.float32)
    raw["fc1_b"] = 0.05 * jax.random.normal(nk(), (HIDDEN,), jnp.float32)
    raw["fc1_bn"] = {
        "gamma": 1.0 + 0.1 * jax.random.normal(nk(), (HIDDEN,), jnp.float32),
        "beta": 0.1 * jax.random.normal(nk(), (HIDDEN,), jnp.float32),
        "mean": 0.1 * jax.random.normal(nk(), (HIDDEN,), jnp.float32),
        "var": jax.random.uniform(nk(), (HIDDEN,), jnp.float32, 0.5, 1.5),
    }
    raw["fc2_w"] = 0.05 * jax.random.normal(nk(), (HIDDEN, NUM_CLASSES), jnp.float32)
    raw["fc2_b"] = 0.05 * jax.random.normal(nk(), (NUM_CLASSES,), jnp.float32)
    return raw


def pack_params(raw):
    """Fold eval-mode BatchNorm, pad channels 100->128, stack the three conv branches on
    the lane axis (per tap index in the max-padded window), cast matmul operands to bf16."""
    E = raw["embedding"].shape[1]
    C = NUM_FEAT_MAPS

    w_stack = jnp.zeros((NTAPS, E, CS), jnp.float32)
    off = jnp.zeros((1, CS), jnp.float32)
    for bi, k in enumerate(KERNEL_SIZES):
        bn = raw["conv_bn"][k]
        scale = bn["gamma"] / jnp.sqrt(bn["var"] + BN_EPS)                 # (C,)
        wk = raw["conv_w"][k] * scale[None, None, :]                       # fold BN scale
        start_tap = MAXPAD - (k - 1) // 2
        w_stack = w_stack.at[start_tap:start_tap + k, :,
                             bi * CPAD: bi * CPAD + C].set(wk)
        off = off.at[0, bi * CPAD: bi * CPAD + C].set(
            (raw["conv_b"][k] - bn["mean"]) * scale + bn["beta"])

    bn1 = raw["fc1_bn"]
    s1 = bn1["gamma"] / jnp.sqrt(bn1["var"] + BN_EPS)
    w1f = raw["fc1_w"] * s1[None, :]                                       # (300, 128)
    b1f = (raw["fc1_b"] - bn1["mean"]) * s1 + bn1["beta"]
    w1 = jnp.zeros((CS, HIDDEN), jnp.float32)
    for bi in range(len(KERNEL_SIZES)):
        w1 = w1.at[bi * CPAD: bi * CPAD + C, :].set(
            w1f[bi * C:(bi + 1) * C, :])

    w2 = jnp.zeros((HIDDEN, CLS_PAD), jnp.float32).at[:, :NUM_CLASSES].set(raw["fc2_w"])
    b2 = jnp.zeros((1, CLS_PAD), jnp.float32).at[0, :NUM_CLASSES].set(raw["fc2_b"])

    return {
        "embedding": raw["embedding"].astype(jnp.bfloat16),
        "w_stack": w_stack.astype(jnp.bfloat16),
        "off_stack": off,                                  # f32, fused with mask in wrapper
        "w1": w1.astype(jnp.bfloat16), "b1": b1f[None, :],
        "w2": w2.astype(jnp.bfloat16), "b2": b2,
    }


# ----------------------------------------------------------------------------------- #
# Pure-JAX f32 reference (eval-mode PyTorch semantics)                                 #
# ----------------------------------------------------------------------------------- #
def reference_forward(tokens, masks, raw):
    B, L = tokens.shape
    x = jnp.take(raw["embedding"], tokens, axis=0) * masks.astype(jnp.float32)[:, :, None]
    feats = []
    for k in KERNEL_SIZES:
        pad = (k - 1) // 2
        xp = jnp.pad(x, ((0, 0), (pad, pad), (0, 0)))
        l_out = L + 2 * pad - k + 1
        w = raw["conv_w"][k]
        conv = sum(jnp.einsum("ble,ec->blc", xp[:, dt:dt + l_out, :], w[dt])
                   for dt in range(k))
        conv = conv + raw["conv_b"][k][None, None, :]
        bn = raw["conv_bn"][k]
        scale = bn["gamma"] / jnp.sqrt(bn["var"] + BN_EPS)
        conv = (conv - bn["mean"]) * scale + bn["beta"]
        feats.append(jnp.max(jnp.maximum(conv, 0.0), axis=1))
    features = jnp.concatenate(feats, axis=1)                              # (B, 300)
    bn1 = raw["fc1_bn"]
    s1 = bn1["gamma"] / jnp.sqrt(bn1["var"] + BN_EPS)
    h = (features @ raw["fc1_w"] + raw["fc1_b"] - bn1["mean"]) * s1 + bn1["beta"]
    h = jnp.maximum(h, 0.0)
    return h @ raw["fc2_w"] + raw["fc2_b"]


if __name__ == "__main__":
    key = jax.random.PRNGKey(0)
    kp, kt, kl = jax.random.split(key, 3)

    B, L, VOCAB, EMB = 16, 16, 50, 32
    raw = init_raw_params(kp, VOCAB, EMB)
    packed = pack_params(raw)

    tokens = jax.random.randint(kt, (B, L), 0, VOCAB, dtype=jnp.int32)
    lens = jax.random.randint(kl, (B,), L // 2, L + 1, dtype=jnp.int32)
    masks = (jnp.arange(L)[None, :] < lens[:, None]).astype(jnp.float32)   # (B, L)

    logits = topic_class_cnn_forward(tokens, masks, packed)                # auto tile, grid>=2
    logits = jax.block_until_ready(logits)

    assert logits.shape == (B, NUM_CLASSES)
    assert bool(jnp.all(jnp.isfinite(logits)))
    ref = reference_forward(tokens, masks, raw)
    max_err = float(jnp.max(jnp.abs(logits - ref)))
    # bf16 conv + bf16 FC pipeline vs f32 reference: bf16-level tolerance.
    assert jnp.allclose(logits, ref, rtol=5e-2, atol=1e-1), f"max abs err = {max_err}"

    print("KERNEL_OK")
</pallas_src>

<mosaic_0001>
module attributes {stable_mosaic.version = 11 : i64} {
  func.func @topic_cnn_kernel(%arg0: i32, %arg1: memref<8x20x32xbf16, #tpu.memory_space<vmem>>, %arg2: memref<5x32x384xbf16, #tpu.memory_space<vmem>>, %arg3: memref<1x16x384xf32, #tpu.memory_space<vmem>>, %arg4: memref<384x128xbf16, #tpu.memory_space<vmem>>, %arg5: memref<1x128xf32, #tpu.memory_space<vmem>>, %arg6: memref<128x128xbf16, #tpu.memory_space<vmem>>, %arg7: memref<1x128xf32, #tpu.memory_space<vmem>>, %arg8: memref<8x128xf32, #tpu.memory_space<vmem>>) attributes {dimension_semantics = [#tpu.dimension_semantics<parallel>], iteration_bounds = array<i64: 2>, scalar_prefetch = 0 : i64, scratch_operands = 0 : i64, tpu.core_type = #tpu.core_type<tc>, window_params = [{transform_indices = @transform_0, window_bounds = array<i64: 8, 20, 32>}, {pipeline_mode = #tpu.pipeline_mode<synchronous>, transform_indices = @transform_1, window_bounds = array<i64: 5, 32, 384>}, {pipeline_mode = #tpu.pipeline_mode<synchronous>, transform_indices = @transform_2, window_bounds = array<i64: 1, 16, 384>}, {pipeline_mode = #tpu.pipeline_mode<synchronous>, transform_indices = @transform_3, window_bounds = array<i64: 384, 128>}, {pipeline_mode = #tpu.pipeline_mode<synchronous>, transform_indices = @transform_4, window_bounds = array<i64: 1, 128>}, {pipeline_mode = #tpu.pipeline_mode<synchronous>, transform_indices = @transform_5, window_bounds = array<i64: 128, 128>}, {pipeline_mode = #tpu.pipeline_mode<synchronous>, transform_indices = @transform_6, window_bounds = array<i64: 1, 128>}, {transform_indices = @transform_7, window_bounds = array<i64: 8, 128>}]} {
    %c0 = arith.constant 0 : index
    %c0_0 = arith.constant 0 : index
    %c0_1 = arith.constant 0 : index
    %0 = vector.load %arg1[%c0, %c0_0, %c0_1] : memref<8x20x32xbf16, #tpu.memory_space<vmem>>, vector<8x20x32xbf16>
    %1 = vector.extract_strided_slice %0 {offsets = [0, 0, 0], sizes = [8, 16, 32], strides = [1, 1, 1]} : vector<8x20x32xbf16> to vector<8x16x32xbf16>
    %2 = vector.shape_cast %1 : vector<8x16x32xbf16> to vector<128x32xbf16>
    %c0_2 = arith.constant 0 : index
    %c0_3 = arith.constant 0 : index
    %c0_4 = arith.constant 0 : index
    %3 = vector.load %arg2[%c0_2, %c0_3, %c0_4] : memref<5x32x384xbf16, #tpu.memory_space<vmem>>, vector<1x32x384xbf16>
    %4 = vector.shape_cast %3 : vector<1x32x384xbf16> to vector<32x384xbf16>
    %cst = arith.constant dense<0.000000e+00> : vector<128x384xf32>
    %5 = tpu.matmul %2, %4, %cst {dimension_numbers = #tpu.dot_dimension_numbers<[1], [0], [0], [1], [0, 0, 1, 1], [], []>} : vector<128x32xbf16>, vector<32x384xbf16>, vector<128x384xf32> -> vector<128x384xf32>
    %6 = vector.extract_strided_slice %0 {offsets = [0, 1, 0], sizes = [8, 16, 32], strides = [1, 1, 1]} : vector<8x20x32xbf16> to vector<8x16x32xbf16>
    %7 = vector.shape_cast %6 : vector<8x16x32xbf16> to vector<128x32xbf16>
    %c1 = arith.constant 1 : index
    %c0_5 = arith.constant 0 : index
    %c0_6 = arith.constant 0 : index
    %8 = vector.load %arg2[%c1, %c0_5, %c0_6] : memref<5x32x384xbf16, #tpu.memory_space<vmem>>, vector<1x32x384xbf16>
    %9 = vector.shape_cast %8 : vector<1x32x384xbf16> to vector<32x384xbf16>
    %cst_7 = arith.constant dense<0.000000e+00> : vector<128x384xf32>
    %10 = tpu.matmul %7, %9, %cst_7 {dimension_numbers = #tpu.dot_dimension_numbers<[1], [0], [0], [1], [0, 0, 1, 1], [], []>} : vector<128x32xbf16>, vector<32x384xbf16>, vector<128x384xf32> -> vector<128x384xf32>
    %11 = arith.addf %5, %10 : vector<128x384xf32>
    %12 = vector.extract_strided_slice %0 {offsets = [0, 2, 0], sizes = [8, 16, 32], strides = [1, 1, 1]} : vector<8x20x32xbf16> to vector<8x16x32xbf16>
    %13 = vector.shape_cast %12 : vector<8x16x32xbf16> to vector<128x32xbf16>
    %c2 = arith.constant 2 : index
    %c0_8 = arith.constant 0 : index
    %c0_9 = arith.constant 0 : index
    %14 = vector.load %arg2[%c2, %c0_8, %c0_9] : memref<5x32x384xbf16, #tpu.memory_space<vmem>>, vector<1x32x384xbf16>
    %15 = vector.shape_cast %14 : vector<1x32x384xbf16> to vector<32x384xbf16>
    %cst_10 = arith.constant dense<0.000000e+00> : vector<128x384xf32>
    %16 = tpu.matmul %13, %15, %cst_10 {dimension_numbers = #tpu.dot_dimension_numbers<[1], [0], [0], [1], [0, 0, 1, 1], [], []>} : vector<128x32xbf16>, vector<32x384xbf16>, vector<128x384xf32> -> vector<128x384xf32>
    %17 = arith.addf %11, %16 : vector<128x384xf32>
    %18 = vector.extract_strided_slice %0 {offsets = [0, 3, 0], sizes = [8, 16, 32], strides = [1, 1, 1]} : vector<8x20x32xbf16> to vector<8x16x32xbf16>
    %19 = vector.shape_cast %18 : vector<8x16x32xbf16> to vector<128x32xbf16>
    %c3 = arith.constant 3 : index
    %c0_11 = arith.constant 0 : index
    %c0_12 = arith.constant 0 : index
    %20 = vector.load %arg2[%c3, %c0_11, %c0_12] : memref<5x32x384xbf16, #tpu.memory_space<vmem>>, vector<1x32x384xbf16>
    %21 = vector.shape_cast %20 : vector<1x32x384xbf16> to vector<32x384xbf16>
    %cst_13 = arith.constant dense<0.000000e+00> : vector<128x384xf32>
    %22 = tpu.matmul %19, %21, %cst_13 {dimension_numbers = #tpu.dot_dimension_numbers<[1], [0], [0], [1], [0, 0, 1, 1], [], []>} : vector<128x32xbf16>, vector<32x384xbf16>, vector<128x384xf32> -> vector<128x384xf32>
    %23 = arith.addf %17, %22 : vector<128x384xf32>
    %24 = vector.extract_strided_slice %0 {offsets = [0, 4, 0], sizes = [8, 16, 32], strides = [1, 1, 1]} : vector<8x20x32xbf16> to vector<8x16x32xbf16>
    %25 = vector.shape_cast %24 : vector<8x16x32xbf16> to vector<128x32xbf16>
    %c4 = arith.constant 4 : index
    %c0_14 = arith.constant 0 : index
    %c0_15 = arith.constant 0 : index
    %26 = vector.load %arg2[%c4, %c0_14, %c0_15] : memref<5x32x384xbf16, #tpu.memory_space<vmem>>, vector<1x32x384xbf16>
    %27 = vector.shape_cast %26 : vector<1x32x384xbf16> to vector<32x384xbf16>
    %cst_16 = arith.constant dense<0.000000e+00> : vector<128x384xf32>
    %28 = tpu.matmul %25, %27, %cst_16 {dimension_numbers = #tpu.dot_dimension_numbers<[1], [0], [0], [1], [0, 0, 1, 1], [], []>} : vector<128x32xbf16>, vector<32x384xbf16>, vector<128x384xf32> -> vector<128x384xf32>
    %29 = arith.addf %23, %28 : vector<128x384xf32>
    %30 = vector.shape_cast %29 : vector<128x384xf32> to vector<8x16x384xf32>
    %c0_17 = arith.constant 0 : index
    %c0_18 = arith.constant 0 : index
    %c0_19 = arith.constant 0 : index
    %31 = vector.load %arg3[%c0_17, %c0_18, %c0_19] : memref<1x16x384xf32, #tpu.memory_space<vmem>>, vector<1x16x384xf32>
    %32 = vector.broadcast %31 : vector<1x16x384xf32> to vector<8x16x384xf32>
    %33 = arith.addf %30, %32 : vector<8x16x384xf32>
    %cst_20 = arith.constant 0.000000e+00 : f32
    %34 = vector.broadcast %cst_20 : f32 to vector<8x16x384xf32>
    %35 = arith.maximumf %33, %34 : vector<8x16x384xf32>
    %cst_21 = arith.constant dense<0xFF800000> : vector<8x384xf32>
    %36 = vector.multi_reduction <maximumf>, %35, %cst_21 [1] : vector<8x16x384xf32> to vector<8x384xf32>
    %37 = arith.truncf %36 : vector<8x384xf32> to vector<8x384xbf16>
    %c0_22 = arith.constant 0 : index
    %c0_23 = arith.constant 0 : index
    %38 = vector.load %arg4[%c0_22, %c0_23] : memref<384x128xbf16, #tpu.memory_space<vmem>>, vector<384x128xbf16>
    %cst_24 = arith.constant dense<0.000000e+00> : vector<8x128xf32>
    %39 = tpu.matmul %37, %38, %cst_24 {dimension_numbers = #tpu.dot_dimension_numbers<[1], [0], [0], [1], [0, 0, 1, 1], [], []>} : vector<8x384xbf16>, vector<384x128xbf16>, vector<8x128xf32> -> vector<8x128xf32>
    %c0_25 = arith.constant 0 : index
    %c0_26 = arith.constant 0 : index
    %40 = vector.load %arg5[%c0_25, %c0_26] : memref<1x128xf32, #tpu.memory_space<vmem>>, vector<1x128xf32>
    %41 = vector.broadcast %40 : vector<1x128xf32> to vector<8x128xf32>
    %42 = arith.addf %39, %41 : vector<8x128xf32>
    %cst_27 = arith.constant 0.000000e+00 : f32
    %43 = vector.broadcast %cst_27 : f32 to vector<8x128xf32>
    %44 = arith.maximumf %42, %43 : vector<8x128xf32>
    %45 = arith.truncf %44 : vector<8x128xf32> to vector<8x128xbf16>
    %c0_28 = arith.constant 0 : index
    %c0_29 = arith.constant 0 : index
    %46 = vector.load %arg6[%c0_28, %c0_29] : memref<128x128xbf16, #tpu.memory_space<vmem>>, vector<128x128xbf16>
    %cst_30 = arith.constant dense<0.000000e+00> : vector<8x128xf32>
    %47 = tpu.matmul %45, %46, %cst_30 {dimension_numbers = #tpu.dot_dimension_numbers<[1], [0], [0], [1], [0, 0, 1, 1], [], []>} : vector<8x128xbf16>, vector<128x128xbf16>, vector<8x128xf32> -> vector<8x128xf32>
    %c0_31 = arith.constant 0 : index
    %c0_32 = arith.constant 0 : index
    %48 = vector.load %arg7[%c0_31, %c0_32] : memref<1x128xf32, #tpu.memory_space<vmem>>, vector<1x128xf32>
    %49 = vector.broadcast %48 : vector<1x128xf32> to vector<8x128xf32>
    %50 = arith.addf %47, %49 : vector<8x128xf32>
    %c0_33 = arith.constant 0 : index
    %c0_34 = arith.constant 0 : index
    %51 = vector.load %arg8[%c0_33, %c0_34] : memref<8x128xf32, #tpu.memory_space<vmem>>, vector<8x128xf32>
    tpu.vector_store %arg8[%c0_33, %c0_34], %50 {strides = array<i32>} : memref<8x128xf32, #tpu.memory_space<vmem>>, vector<8x128xf32>,
    return
  }
  func.func @transform_0(%arg0: i32) -> (i32, i32, i32) {
    %c0_i32 = arith.constant 0 : i32
    %c0_i32_0 = arith.constant 0 : i32
    %c0_i32_1 = arith.constant 0 : i32
    return %arg0, %c0_i32, %c0_i32_0 : i32, i32, i32
  }
  func.func @transform_1(%arg0: i32) -> (i32, i32, i32) {
    %c0_i32 = arith.constant 0 : i32
    %c0_i32_0 = arith.constant 0 : i32
    %c0_i32_1 = arith.constant 0 : i32
    %c0_i32_2 = arith.constant 0 : i32
    return %c0_i32, %c0_i32_0, %c0_i32_1 : i32, i32, i32
  }
  func.func @transform_2(%arg0: i32) -> (i32, i32, i32) {
    %c0_i32 = arith.constant 0 : i32
    %c0_i32_0 = arith.constant 0 : i32
    %c0_i32_1 = arith.constant 0 : i32
    %c0_i32_2 = arith.constant 0 : i32
    return %c0_i32, %c0_i32_0, %c0_i32_1 : i32, i32, i32
  }
  func.func @transform_3(%arg0: i32) -> (i32, i32) {
    %c0_i32 = arith.constant 0 : i32
    %c0_i32_0 = arith.constant 0 : i32
    %c0_i32_1 = arith.constant 0 : i32
    return %c0_i32, %c0_i32_0 : i32, i32
  }
  func.func @transform_4(%arg0: i32) -> (i32, i32) {
    %c0_i32 = arith.constant 0 : i32
    %c0_i32_0 = arith.constant 0 : i32
    %c0_i32_1 = arith.constant 0 : i32
    return %c0_i32, %c0_i32_0 : i32, i32
  }
  func.func @transform_5(%arg0: i32) -> (i32, i32) {
    %c0_i32 = arith.constant 0 : i32
    %c0_i32_0 = arith.constant 0 : i32
    %c0_i32_1 = arith.constant 0 : i32
    return %c0_i32, %c0_i32_0 : i32, i32
  }
  func.func @transform_6(%arg0: i32) -> (i32, i32) {
    %c0_i32 = arith.constant 0 : i32
    %c0_i32_0 = arith.constant 0 : i32
    %c0_i32_1 = arith.constant 0 : i32
    return %c0_i32, %c0_i32_0 : i32, i32
  }
  func.func @transform_7(%arg0: i32) -> (i32, i32) {
    %c0_i32 = arith.constant 0 : i32
    %c0_i32_0 = arith.constant 0 : i32
    return %arg0, %c0_i32 : i32, i32
  }
}

</mosaic_0001>

<llo_original>
// kernel: tpu_custom_call.1
$region0: #{tpu_custom_call.1}
  #allocation0 [shape = 'u32[]', space=smem, size = 0x4, offset = 0x4, fixed_abs, tag = 'smem constant byte address 0x4 - core index']
  #allocation1 [shape = 'u32[144,128]{1,0:T(1,128)}', space=vmem, size = 0x12000, scoped, tag = 'internal scratch']
  %s0 = inlined_call_operand.vmem [shape: bf16[16,20,32], index: 0, kind: input, shape index: {}]
  %s1 = inlined_call_operand.vmem [shape: bf16[5,32,384], index: 1, kind: input, shape index: {}]
  %s2 = inlined_call_operand.vmem [shape: f32[1,16,384], index: 2, kind: input, shape index: {}]
  %s3 = inlined_call_operand.hbm [shape: bf16[384,128], index: 3, kind: input, shape index: {}]
  %s4 = inlined_call_operand.vmem [shape: f32[1,128], index: 4, kind: input, shape index: {}]
  %s5 = inlined_call_operand.vmem [shape: bf16[128,128], index: 5, kind: input, shape index: {}]
  %s6 = inlined_call_operand.vmem [shape: f32[1,128], index: 6, kind: input, shape index: {}]
  %s7 = inlined_call_operand.hbm [shape: f32[16,128], index: 7, kind: output, shape index: {}]
  %s8 = sld [smem:[#allocation0]]
  $region65: #{tpu_custom_call.1} parent=0
    _
  %s10 = ssub.s32 1, %s8
  %s11 = scalar_select 0, %s10, %s8
  $region1: #{tpu_custom_call.1} parent=0
    #allocation2 [shape = 'u8[98304]{0}', space=vmem, size = 0x18000, scoped, tag = 'input window, operand 3, single buffered']
    #allocation3 [shape = 's32[2]{0}', space=sflag, size = 0x8, scoped, tag = 'scoped memory for tpu_custom_call.1']
    #allocation4 [shape = 's32[2]{0}', space=sflag, size = 0x8, scoped, tag = 'scoped memory for tpu_custom_call.1']
    #allocation5 [shape = 'u8[8192]{0}', space=vmem, size = 0x2000, scoped, tag = 'output window, operand 0']
    %12 = vsyncpa [#allocation3], 0
    %13 = vsyncpa [#allocation4], 0
    %s14 = scalar_lea.sflag [#allocation4], 1
    %15 = vsyncpa %s14, 0
    loop: start=0, step=1, limit=4
    $region2: #{tpu_custom_call.1} parent=1 // loop_pre_header
      _
    $region3: #{tpu_custom_call.1} parent=1 // loop_header
      %s17 = sphi 0, %s21
      %p18 = scmp.ge.s32.totalorder %s17, 4
      %s27 = sphi 0, %s29
      %s30 = sphi 0, %s27
      %s31 = sphi 0, %s30
      %s47 = sphi 0, %s31
      %s51 = sphi 0, %s51
      %s53 = sphi 0, %s51
      %s54 = sphi 0, %s53
      %s68 = sphi 0, %s54
      %s72 = sphi 0, %s72
      %s74 = sphi 0, %s72
      %s75 = sphi 0, %s74
      %s89 = sphi 0, %s75
      %s93 = sphi 0, %s93
      %s95 = sphi 0, %s93
      %s96 = sphi 0, %s95
      %s110 = sphi 0, %s96
      %s114 = sphi 0, %s114
      %s116 = sphi 0, %s114
      %s117 = sphi 0, %s116
      %s131 = sphi 0, %s117
      %s135 = sphi 0, %s135
      %s137 = sphi 0, %s135
      %s138 = sphi 0, %s137
      %s152 = sphi 0, %s138
      %s156 = sphi 0, %s156
      %s158 = sphi 0, %s156
      %s159 = sphi 0, %s158
      %s173 = sphi 0, %s159
      %s179 = sphi 0, %s181
      %s182 = sphi 0, %s179
      %s183 = sphi 0, %s182
      %s199 = sphi 0, %s183
    $region4: #{tpu_custom_call.1} parent=1 // loop_header_branch
      %20 = sbr.rel (%p18) target = $region8
    $region5: #{tpu_custom_call.1} parent=1 // loop_body
      %s22 = ssub.s32 %s17, 1
      %s23 = ssub.s32 %s17, 2
      %s24 = sadd.s32 %s17, 1
      %s25 = ssub.s32 %s17, %s24
      %p26 = scmp.eq.s32.totalorder %s25, 0
      %s28 = sadd.s32 %s27, 1
      %s29 = scalar_select %p26, %s27, %s28
      %p32 = pneg %p26
      %p33 = scmp.eq.s32.totalorder %s17, 1
      %p34 = por %p32, %p33
      %p35 = scmp.ne.s32.totalorder %s27, %s30
      %p36 = scmp.eq.s32.totalorder %s17, 0
      %p37 = por %p35, %p36
      %p38 = scmp.ne.s32.totalorder %s27, %s30
      %p39 = scmp.eq.s32.totalorder %s22, 1
      %p40 = por %p38, %p39
      %p41 = scmp.ne.s32.totalorder %s30, %s31
      %p42 = scmp.eq.s32.totalorder %s22, 0
      %p43 = por %p41, %p42
      %p44 = scmp.ne.s32.totalorder %s30, %s31
      %p45 = scmp.eq.s32.totalorder %s23, 1
      %p46 = por %p44, %p45
      %p48 = scmp.ne.s32.totalorder %s31, %s47
      %p49 = scmp.eq.s32.totalorder %s23, 0
      %p50 = por %p48, %p49
      %s52 = sadd.s32 %s51, 1
      %p55 = scmp.eq.s32.totalorder %s17, 1
      %p56 = scmp.ne.s32.totalorder %s51, %s53
      %p57 = scmp.eq.s32.totalorder %s17, 0
      %p58 = por %p56, %p57
      %p59 = scmp.ne.s32.totalorder %s51, %s53
      %p60 = scmp.eq.s32.totalorder %s22, 1
      %p61 = por %p59, %p60
      %p62 = scmp.ne.s32.totalorder %s53, %s54
      %p63 = scmp.eq.s32.totalorder %s22, 0
      %p64 = por %p62, %p63
      %p65 = scmp.ne.s32.totalorder %s53, %s54
      %p66 = scmp.eq.s32.totalorder %s23, 1
      %p67 = por %p65, %p66
      %p69 = scmp.ne.s32.totalorder %s54, %s68
      %p70 = scmp.eq.s32.totalorder %s23, 0
      %p71 = por %p69, %p70
      %s73 = sadd.s32 %s72, 1
      %p76 = scmp.eq.s32.totalorder %s17, 1
      %p77 = scmp.ne.s32.totalorder %s72, %s74
      %p78 = scmp.eq.s32.totalorder %s17, 0
      %p79 = por %p77, %p78
      %p80 = scmp.ne.s32.totalorder %s72, %s74
      %p81 = scmp.eq.s32.totalorder %s22, 1
      %p82 = por %p80, %p81
      %p83 = scmp.ne.s32.totalorder %s74, %s75
      %p84 = scmp.eq.s32.totalorder %s22, 0
      %p85 = por %p83, %p84
      %p86 = scmp.ne.s32.totalorder %s74, %s75
      %p87 = scmp.eq.s32.totalorder %s23, 1
      %p88 = por %p86, %p87
      %p90 = scmp.ne.s32.totalorder %s75, %s89
      %p91 = scmp.eq.s32.totalorder %s23, 0
      %p92 = por %p90, %p91
      %s94 = sadd.s32 %s93, 1
      %p97 = scmp.eq.s32.totalorder %s17, 1
      %p98 = scmp.ne.s32.totalorder %s93, %s95
      %p99 = scmp.eq.s32.totalorder %s17, 0
      %p100 = por %p98, %p99
      %p101 = scmp.ne.s32.totalorder %s93, %s95
      %p102 = scmp.eq.s32.totalorder %s22, 1
      %p103 = por %p101, %p102
      %p104 = scmp.ne.s32.totalorder %s95, %s96
      %p105 = scmp.eq.s32.totalorder %s22, 0
      %p106 = por %p104, %p105
      %p107 = scmp.ne.s32.totalorder %s95, %s96
      %p108 = scmp.eq.s32.totalorder %s23, 1
      %p109 = por %p107, %p108
      %p111 = scmp.ne.s32.totalorder %s96, %s110
      %p112 = scmp.eq.s32.totalorder %s23, 0
      %p113 = por %p111, %p112
      %s115 = sadd.s32 %s114, 1
      %p118 = scmp.eq.s32.totalorder %s17, 1
      %p119 = scmp.ne.s32.totalorder %s114, %s116
      %p120 = scmp.eq.s32.totalorder %s17, 0
      %p121 = por %p119, %p120
      %p122 = scmp.ne.s32.totalorder %s114, %s116
      %p123 = scmp.eq.s32.totalorder %s22, 1
      %p124 = por %p122, %p123
      %p125 = scmp.ne.s32.totalorder %s116, %s117
      %p126 = scmp.eq.s32.totalorder %s22, 0
      %p127 = por %p125, %p126
      %p128 = scmp.ne.s32.totalorder %s116, %s117
      %p129 = scmp.eq.s32.totalorder %s23, 1
      %p130 = por %p128, %p129
      %p132 = scmp.ne.s32.totalorder %s117, %s131
      %p133 = scmp.eq.s32.totalorder %s23, 0
      %p134 = por %p132, %p133
      %s136 = sadd.s32 %s135, 1
      %p139 = scmp.eq.s32.totalorder %s17, 1
      %p140 = scmp.ne.s32.totalorder %s135, %s137
      %p141 = scmp.eq.s32.totalorder %s17, 0
      %p142 = por %p140, %p141
      %p143 = scmp.ne.s32.totalorder %s135, %s137
      %p144 = scmp.eq.s32.totalorder %s22, 1
      %p145 = por %p143, %p144
      %p146 = scmp.ne.s32.totalorder %s137, %s138
      %p147 = scmp.eq.s32.totalorder %s22, 0
      %p148 = por %p146, %p147
      %p149 = scmp.ne.s32.totalorder %s137, %s138
      %p150 = scmp.eq.s32.totalorder %s23, 1
      %p151 = por %p149, %p150
      %p153 = scmp.ne.s32.totalorder %s138, %s152
      %p154 = scmp.eq.s32.totalorder %s23, 0
      %p155 = por %p153, %p154
      %s157 = sadd.s32 %s156, 1
      %p160 = scmp.eq.s32.totalorder %s17, 1
      %p161 = scmp.ne.s32.totalorder %s156, %s158
      %p162 = scmp.eq.s32.totalorder %s17, 0
      %p163 = por %p161, %p162
      %p164 = scmp.ne.s32.totalorder %s156, %s158
      %p165 = scmp.eq.s32.totalorder %s22, 1
      %p166 = por %p164, %p165
      %p167 = scmp.ne.s32.totalorder %s158, %s159
      %p168 = scmp.eq.s32.totalorder %s22, 0
      %p169 = por %p167, %p168
      %p170 = scmp.ne.s32.totalorder %s158, %s159
      %p171 = scmp.eq.s32.totalorder %s23, 1
      %p172 = por %p170, %p171
      %p174 = scmp.ne.s32.totalorder %s159, %s173
      %p175 = scmp.eq.s32.totalorder %s23, 0
      %p176 = por %p174, %p175
      %s177 = ssub.s32 %s17, %s24
      %p178 = scmp.eq.s32.totalorder %s177, 0
      %s180 = sadd.s32 %s179, 1
      %s181 = scalar_select %p178, %s179, %s180
      %p184 = pneg %p178
      %p185 = scmp.eq.s32.totalorder %s17, 1
      %p186 = por %p184, %p185
      %p187 = scmp.ne.s32.totalorder %s179, %s182
      %p188 = scmp.eq.s32.totalorder %s17, 0
      %p189 = por %p187, %p188
      %p190 = scmp.ne.s32.totalorder %s179, %s182
      %p191 = scmp.eq.s32.totalorder %s22, 1
      %p192 = por %p190, %p191
      %p193 = scmp.ne.s32.totalorder %s182, %s183
      %p194 = scmp.eq.s32.totalorder %s22, 0
      %p195 = por %p193, %p194
      %p196 = scmp.ne.s32.totalorder %s182, %s183
      %p197 = scmp.eq.s32.totalorder %s23, 1
      %p198 = por %p196, %p197
      %p200 = scmp.ne.s32.totalorder %s183, %s199
      %p201 = scmp.eq.s32.totalorder %s23, 0
      %p202 = por %p200, %p201
      %p203 = scmp.le.s32.totalorder 1, %s17
      %p204 = scmp.lt.s32.totalorder %s17, 3
      %p205 = pnand %p203, %p204
      %p206 = pneg %p205
      // Predicated region
      $region9: #{tpu_custom_call.1} parent=5 // pred_check
        _
      $region10: #{tpu_custom_call.1} parent=5 // pred_check_branch
        %208 = sbr.rel (%p205) target = $region12
      $region11: #{tpu_custom_call.1} parent=5 // pred_region
        %s209 = ssub.s32 %s17, 1
        // Predicated region
        $region13: #{tpu_custom_call.1} parent=11 // pred_check
          %p210 = pneg %p64
        $region14: #{tpu_custom_call.1} parent=11 // pred_check_branch
          %212 = sbr.rel (%p210) target = $region16
        $region15: #{tpu_custom_call.1} parent=11 // pred_region
          _
        $region16: #{tpu_custom_call.1} parent=11 // pred_fallthru
          _
        // Predicated region
        $region17: #{tpu_custom_call.1} parent=11 // pred_check
          %p213 = pneg %p85
        $region18: #{tpu_custom_call.1} parent=11 // pred_check_branch
          %215 = sbr.rel (%p213) target = $region20
        $region19: #{tpu_custom_call.1} parent=11 // pred_region
          _
        $region20: #{tpu_custom_call.1} parent=11 // pred_fallthru
          _
        // Predicated region
        $region21: #{tpu_custom_call.1} parent=11 // pred_check
          %p216 = pneg %p106
        $region22: #{tpu_custom_call.1} parent=11 // pred_check_branch
          %218 = sbr.rel (%p216) target = $region24
        $region23: #{tpu_custom_call.1} parent=11 // pred_region
          %s220 = ssub.s32 3072, 3072
          %221 = vsyncadd [#allocation3], %s220
          %s222 = sshll.u32 [#allocation2], 4
          %s223 = int_to_ptr.vmem [resolvable:$true] %s222
          %228 = dma.hbm_to_vmem [thread:$0]  %s3, 3072, %s223, [#allocation3], 64, 64, 4
        $region24: #{tpu_custom_call.1} parent=11 // pred_fallthru
          _
        // Predicated region
        $region25: #{tpu_custom_call.1} parent=11 // pred_check
          %p229 = pneg %p127
        $region26: #{tpu_custom_call.1} parent=11 // pred_check_branch
          %231 = sbr.rel (%p229) target = $region28
        $region27: #{tpu_custom_call.1} parent=11 // pred_region
          _
        $region28: #{tpu_custom_call.1} parent=11 // pred_fallthru
          _
        // Predicated region
        $region29: #{tpu_custom_call.1} parent=11 // pred_check
          %p232 = pneg %p148
        $region30: #{tpu_custom_call.1} parent=11 // pred_check_branch
          %234 = sbr.rel (%p232) target = $region32
        $region31: #{tpu_custom_call.1} parent=11 // pred_region
          _
        $region32: #{tpu_custom_call.1} parent=11 // pred_fallthru
          _
        // Predicated region
        $region33: #{tpu_custom_call.1} parent=11 // pred_check
          %p235 = pneg %p169
        $region34: #{tpu_custom_call.1} parent=11 // pred_check_branch
          %237 = sbr.rel (%p235) target = $region36
        $region35: #{tpu_custom_call.1} parent=11 // pred_region
          _
        $region36: #{tpu_custom_call.1} parent=11 // pred_fallthru
          _
      $region12: #{tpu_custom_call.1} parent=5 // pred_fallthru
        _
      %p238 = scmp.lt.s32.totalorder %s17, 2
      // Predicated region
      $region37: #{tpu_custom_call.1} parent=5 // pred_check
        %p239 = pneg %p238
      $region38: #{tpu_custom_call.1} parent=5 // pred_check_branch
        %241 = sbr.rel (%p239) target = $region40
      $region39: #{tpu_custom_call.1} parent=5 // pred_region
        // Predicated region
        $region41: #{tpu_custom_call.1} parent=39 // pred_check
          %p242 = pneg %p37
        $region42: #{tpu_custom_call.1} parent=39 // pred_check_branch
          %244 = sbr.rel (%p242) target = $region44
        $region43: #{tpu_custom_call.1} parent=39 // pred_region
          %s245 = smul.u32 8, %s17
          %p246 = scmp.lt.s32.totalorder %s245, 15
          %s247 = scalar_select %p246, %s245, 15
          %s248 = smul.addr %s247, 3
          %s249 = smul.addr %s248, 4
          %s250 = scalar_lea.vmem %s0, %s249
          %s251 = smul.u32 8, %s17
        $region44: #{tpu_custom_call.1} parent=39 // pred_fallthru
          _
      $region40: #{tpu_custom_call.1} parent=5 // pred_fallthru
        _
      %p252 = scmp.le.s32.totalorder 1, %s17
      %p253 = scmp.lt.s32.totalorder %s17, 3
      %p254 = pnand %p252, %p253
      %p255 = pneg %p254
      // Predicated region
      $region45: #{tpu_custom_call.1} parent=5 // pred_check
        _
      $region46: #{tpu_custom_call.1} parent=5 // pred_check_branch
        %257 = sbr.rel (%p254) target = $region48
      $region47: #{tpu_custom_call.1} parent=5 // pred_region
        %s258 = ssub.s32 %s17, 1
        // Predicated region
        $region49: #{tpu_custom_call.1} parent=47 // pred_check
          %p259 = pneg %p106
        $region50: #{tpu_custom_call.1} parent=47 // pred_check_branch
          %261 = sbr.rel (%p259) target = $region52
        $region51: #{tpu_custom_call.1} parent=47 // pred_region
          %262 = dma.done [#allocation3], 3072
        $region52: #{tpu_custom_call.1} parent=47 // pred_fallthru
          _
        %s263 = smul.u32 8, %s22
        %p264 = scmp.lt.s32.totalorder %s263, 15
        %s265 = scalar_select %p264, %s263, 15
        %s266 = smul.addr %s265, 3
        %s267 = smul.addr %s266, 4
        %s268 = scalar_lea.vmem %s0, %s267
        %p269 = pneg %p43
        %p270 = pneg %p40
        %p271 = pneg %p64
        %p272 = pneg %p61
        %p273 = pneg %p85
        %p274 = pneg %p82
        %p275 = pneg %p106
        %p276 = pneg %p103
        %p277 = pneg %p127
        %p278 = pneg %p124
        %p279 = pneg %p148
        %p280 = pneg %p145
        %p281 = pneg %p169
        %p282 = pneg %p166
        %p283 = pneg %p195
        %p284 = pneg %p192
        %s285 = sand.u32 %s182, 1
        %s286 = scalar_lea.sflag [#allocation4], %s285
        %s287 = sand.u32 %s182, 1
        %s288 = smul.addr %s287, 8
        %s289 = scalar_lea.vmem [#allocation5], %s288
        %s290 = smul.u32 8, %s22
        %p291 = scmp.lt.s32.totalorder %s290, 15
        %s292 = scalar_select %p291, %s290, 15
        %s293 = smul.addr %s292, 3
        %s294 = smul.addr %s293, 4
        %s295 = scalar_lea.vmem %s0, %s294
        %s296 = smul.u32 8, %s22
        %v298 = vld [vmem:[%s295] sm:$0xf]
        %v299 = vld [vmem:[%s295 + $0x4] sm:$0xf]
        %v300 = vld [vmem:[%s295 + $0x8] sm:$0x3]
        %v301 = vld [vmem:[%s295 + $0xc] sm:$0xf]
        %v302 = vld [vmem:[%s295 + $0x10] sm:$0xf]
        %v303 = vld [vmem:[%s295 + $0x14] sm:$0x3]
        %v304 = vld [vmem:[%s295 + $0x18] sm:$0xf]
        %v305 = vld [vmem:[%s295 + $0x1c] sm:$0xf]
        %v306 = vld [vmem:[%s295 + $0x20] sm:$0x3]
        %v307 = vld [vmem:[%s295 + $0x24] sm:$0xf]
        %v308 = vld [vmem:[%s295 + $0x28] sm:$0xf]
        %v309 = vld [vmem:[%s295 + $0x2c] sm:$0x3]
        %v310 = vld [vmem:[%s295 + $0x30] sm:$0xf]
        %v311 = vld [vmem:[%s295 + $0x34] sm:$0xf]
        %v312 = vld [vmem:[%s295 + $0x38] sm:$0x3]
        %v313 = vld [vmem:[%s295 + $0x3c] sm:$0xf]
        %v314 = vld [vmem:[%s295 + $0x40] sm:$0xf]
        %v315 = vld [vmem:[%s295 + $0x44] sm:$0x3]
        %v316 = vld [vmem:[%s295 + $0x48] sm:$0xf]
        %v317 = vld [vmem:[%s295 + $0x4c] sm:$0xf]
        %v318 = vld [vmem:[%s295 + $0x50] sm:$0x3]
        %v319 = vld [vmem:[%s295 + $0x54] sm:$0xf]
        %v320 = vld [vmem:[%s295 + $0x58] sm:$0xf]
        %v321 = vld [vmem:[%s295 + $0x5c] sm:$0x3]
        %v322 = vld [vmem:[%s1] sm:$0xff]
        %v323 = vld [vmem:[%s1 + $0x8] sm:$0xf]
        %v324 = vld [vmem:[%s1 + $0xc] sm:$0xff]
        %v325 = vld [vmem:[%s1 + $0x14] sm:$0xf]
        %v326 = vld [vmem:[%s1 + $0x18] sm:$0xff]
        %v327 = vld [vmem:[%s1 + $0x20] sm:$0xf]
        %v328 = vld [vmem:[%s1 + $0x24] sm:$0xff]
        %v329 = vld [vmem:[%s1 + $0x2c] sm:$0xf]
        %vm330 = vsmask.f32 3328
        %vm331 = vsmask.f32 7440
        %vm332 = vmor %vm330, %vm331
        %v334 = vshrl.u32 %v298, 16
        %v336 = vrot.slane %v334, 4
        %v337 = vshll.u32 %v298, 16
        %v339 = vrot.slane %v337, 5
        %v340 = vor.u32 %v336, %v339
        %v341 = vrot.slane %v340, 4
        %v343 = vshll.u32 %v299, 16
        %v345 = vrot.slane %v343, 5
        %v346 = vsel %vm332, %v341, %v345
        %v347 = vshrl.u32 %v299, 16
        %v349 = vrot.slane %v347, 4
        %v350 = vor.u32 %v349, %v345
        %v351 = vrot.slane %v350, 4
        %v353 = vshll.u32 %v300, 16
        %v355 = vrot.slane %v353, 5
        %v356 = vsel %vm332, %v351, %v355
        %v358 = vshrl.u32 %v301, 16
        %v360 = vrot.slane %v358, 4
        %v361 = vshll.u32 %v301, 16
        %v363 = vrot.slane %v361, 5
        %v364 = vor.u32 %v360, %v363
        %v365 = vrot.slane %v364, 4
        %v367 = vshll.u32 %v302, 16
        %v369 = vrot.slane %v367, 5
        %v370 = vsel %vm332, %v365, %v369
        %v371 = vshrl.u32 %v302, 16
        %v373 = vrot.slane %v371, 4
        %v374 = vor.u32 %v373, %v369
        %v375 = vrot.slane %v374, 4
        %v377 = vshll.u32 %v303, 16
        %v379 = vrot.slane %v377, 5
        %v380 = vsel %vm332, %v375, %v379
        %v382 = vshrl.u32 %v304, 16
        %v384 = vrot.slane %v382, 4
        %v385 = vshll.u32 %v304, 16
        %v387 = vrot.slane %v385, 5
        %v388 = vor.u32 %v384, %v387
        %v389 = vrot.slane %v388, 4
        %v391 = vshll.u32 %v305, 16
        %v393 = vrot.slane %v391, 5
        %v394 = vsel %vm332, %v389, %v393
        %v395 = vshrl.u32 %v305, 16
        %v397 = vrot.slane %v395, 4
        %v398 = vor.u32 %v397, %v393
        %v399 = vrot.slane %v398, 4
        %v401 = vshll.u32 %v306, 16
        %v403 = vrot.slane %v401, 5
        %v404 = vsel %vm332, %v399, %v403
        %v406 = vshrl.u32 %v307, 16
        %v408 = vrot.slane %v406, 4
        %v409 = vshll.u32 %v307, 16
        %v411 = vrot.slane %v409, 5
        %v412 = vor.u32 %v408, %v411
        %v413 = vrot.slane %v412, 4
        %v415 = vshll.u32 %v308, 16
        %v417 = vrot.slane %v415, 5
        %v418 = vsel %vm332, %v413, %v417
        %v419 = vshrl.u32 %v308, 16
        %v421 = vrot.slane %v419, 4
        %v422 = vor.u32 %v421, %v417
        %v423 = vrot.slane %v422, 4
        %v425 = vshll.u32 %v309, 16
        %v427 = vrot.slane %v425, 5
        %v428 = vsel %vm332, %v423, %v427
        %v430 = vshrl.u32 %v310, 16
        %v432 = vrot.slane %v430, 4
        %v433 = vshll.u32 %v310, 16
        %v435 = vrot.slane %v433, 5
        %v436 = vor.u32 %v432, %v435
        %v437 = vrot.slane %v436, 4
        %v439 = vshll.u32 %v311, 16
        %v441 = vrot.slane %v439, 5
        %v442 = vsel %vm332, %v437, %v441
        %v443 = vshrl.u32 %v311, 16
        %v445 = vrot.slane %v443, 4
        %v446 = vor.u32 %v445, %v441
        %v447 = vrot.slane %v446, 4
        %v449 = vshll.u32 %v312, 16
        %v451 = vrot.slane %v449, 5
        %v452 = vsel %vm332, %v447, %v451
        %v454 = vshrl.u32 %v313, 16
        %v456 = vrot.slane %v454, 4
        %v457 = vshll.u32 %v313, 16
        %v459 = vrot.slane %v457, 5
        %v460 = vor.u32 %v456, %v459
        %v461 = vrot.slane %v460, 4
        %v463 = vshll.u32 %v314, 16
        %v465 = vrot.slane %v463, 5
        %v466 = vsel %vm332, %v461, %v465
        %v467 = vshrl.u32 %v314, 16
        %v469 = vrot.slane %v467, 4
        %v470 = vor.u32 %v469, %v465
        %v471 = vrot.slane %v470, 4
        %v473 = vshll.u32 %v315, 16
        %v475 = vrot.slane %v473, 5
        %v476 = vsel %vm332, %v471, %v475
        %v478 = vshrl.u32 %v316, 16
        %v480 = vrot.slane %v478, 4
        %v481 = vshll.u32 %v316, 16
        %v483 = vrot.slane %v481, 5
        %v484 = vor.u32 %v480, %v483
        %v485 = vrot.slane %v484, 4
        %v487 = vshll.u32 %v317, 16
        %v489 = vrot.slane %v487, 5
        %v490 = vsel %vm332, %v485, %v489
        %v491 = vshrl.u32 %v317, 16
        %v493 = vrot.slane %v491, 4
        %v494 = vor.u32 %v493, %v489
        %v495 = vrot.slane %v494, 4
        %v497 = vshll.u32 %v318, 16
        %v499 = vrot.slane %v497, 5
        %v500 = vsel %vm332, %v495, %v499
        %v502 = vshrl.u32 %v319, 16
        %v504 = vrot.slane %v502, 4
        %v505 = vshll.u32 %v319, 16
        %v507 = vrot.slane %v505, 5
        %v508 = vor.u32 %v504, %v507
        %v509 = vrot.slane %v508, 4
        %v511 = vshll.u32 %v320, 16
        %v513 = vrot.slane %v511, 5
        %v514 = vsel %vm332, %v509, %v513
        %v515 = vshrl.u32 %v320, 16
        %v517 = vrot.slane %v515, 4
        %v518 = vor.u32 %v517, %v513
        %v519 = vrot.slane %v518, 4
        %v521 = vshll.u32 %v321, 16
        %v523 = vrot.slane %v521, 5
        %v524 = vsel %vm332, %v519, %v523
        %s525 = scalar_lea.vmem %s1, 48
        %v526 = vld [vmem:[%s525] sm:$0xff]
        %v527 = vld [vmem:[%s525 + $0x8] sm:$0xf]
        %v528 = vld [vmem:[%s525 + $0xc] sm:$0xff]
        %v529 = vld [vmem:[%s525 + $0x14] sm:$0xf]
        %v530 = vld [vmem:[%s525 + $0x18] sm:$0xff]
        %v531 = vld [vmem:[%s525 + $0x20] sm:$0xf]
        %v532 = vld [vmem:[%s525 + $0x24] sm:$0xff]
        %v533 = vld [vmem:[%s525 + $0x2c] sm:$0xf]
        %v534 = vunpack.c.l.b16 %v346
        %v535 = vunpack.c.l.b16 %v356
        %v536 = vunpack.c.l.b16 %v370
        %v537 = vunpack.c.l.b16 %v380
        %v538 = vunpack.c.l.b16 %v394
        %v539 = vunpack.c.l.b16 %v404
        %v540 = vunpack.c.l.b16 %v418
        %v541 = vunpack.c.l.b16 %v428
        %v542 = vunpack.c.l.b16 %v442
        %v543 = vunpack.c.l.b16 %v452
        %v544 = vunpack.c.l.b16 %v466
        %v545 = vunpack.c.l.b16 %v476
        %v546 = vunpack.c.l.b16 %v490
        %v547 = vunpack.c.l.b16 %v500
        %v548 = vunpack.c.l.b16 %v514
        %v549 = vunpack.c.l.b16 %v524
        %v550 = vpack.c.b16 %v535, %v534
        %v551 = vpack.c.b16 %v537, %v536
        %v552 = vpack.c.b16 %v539, %v538
        %v553 = vpack.c.b16 %v541, %v540
        %v554 = vpack.c.b16 %v543, %v542
        %v555 = vpack.c.b16 %v545, %v544
        %v556 = vpack.c.b16 %v547, %v546
        %v557 = vpack.c.b16 %v549, %v548
        %v566 = vunpack.c.l.b16 %v526
        %v567 = vunpack.c.h.b16 %v526
        %v568 = vunpack.c.l.b16 %v527
        %v569 = vunpack.c.l.b16 %v528
        %v570 = vunpack.c.h.b16 %v528
        %v571 = vunpack.c.l.b16 %v529
        %v572 = vunpack.c.l.b16 %v530
        %v573 = vunpack.c.h.b16 %v530
        %v574 = vunpack.c.l.b16 %v531
        %v575 = vunpack.c.l.b16 %v532
        %v576 = vunpack.c.h.b16 %v532
        %v577 = vunpack.c.l.b16 %v533
        %v578 = vpack.c.b16 %v569, %v566
        %v579 = vpack.c.b16 %v570, %v567
        %v580 = vpack.c.b16 %v571, %v568
        %v581 = vpack.c.b16 %v575, %v572
        %v582 = vpack.c.b16 %v576, %v573
        %v583 = vpack.c.b16 %v577, %v574
        %vm590 = vcmask 261120
        %v592 = vsel %vm590, %v550, 0
        %v595 = vsel %vm590, %v551, 0
        %v598 = vsel %vm590, %v552, 0
        %v601 = vsel %vm590, %v553, 0
        %v604 = vsel %vm590, %v554, 0
        %v607 = vsel %vm590, %v555, 0
        %v610 = vsel %vm590, %v556, 0
        %v613 = vsel %vm590, %v557, 0
        %615 = vmatprep.subr.bf16.mxu0 0
        %616 = vmatpush1.bf16.msra.mxu0 0
        %617 = vmatprep.subr.bf16.mxu0 0
        %618 = vmatpush1.bf16.msra.mxu0 0
        %619 = vmatprep.subr.bf16.mxu0 0
        %620 = vmatpush1.bf16.msra.mxu0 0
        %621 = vmatprep.subr.bf16.mxu0 0
        %622 = vmatpush1.bf16.msra.mxu0 0
        %623 = vmatprep.subr.bf16.mxu0 0
        %624 = vmatpush1.bf16.msra.mxu0 0
        %625 = vmatprep.subr.bf16.mxu0 0
        %626 = vmatpush1.bf16.msra.mxu0 0
        %627 = vmatprep.subr.bf16.mxu0 %v582
        %628 = vmatpush1.bf16.msra.mxu0 %v581
        %629 = vmatprep.subr.bf16.mxu0 %v579
        %630 = vmatpush1.bf16.msra.mxu0 %v578
        %631 = vmatprep.subr.bf16.mxu0 0
        %632 = vmatpush2.bf16.msra.mxu0 0
        %633 = vmatprep.subr.bf16.mxu0 0
        %634 = vmatpush2.bf16.msra.mxu0 0
        %635 = vmatprep.subr.bf16.mxu0 0
        %636 = vmatpush2.bf16.msra.mxu0 0
        %637 = vmatprep.subr.bf16.mxu0 0
        %638 = vmatpush2.bf16.msra.mxu0 0
        %639 = vmatprep.subr.bf16.mxu0 0
        %640 = vmatpush2.bf16.msra.mxu0 0
        %641 = vmatprep.subr.bf16.mxu0 0
        %642 = vmatpush2.bf16.msra.mxu0 0
        %643 = vmatprep.subr.bf16.mxu0 0
        %644 = vmatpush2.bf16.msra.mxu0 0
        %645 = vmatprep.subr.bf16.mxu0 0
        %646 = vmatpush2.bf16.msra.mxu0 0
        %647 = vmatprep.mubr.bf16.mxu0 0
        %648 = vmatmul.mubr.bf16.gmra.mxu0 %v592
        %v649 = vpop.f32.mrf.mxu0
        %v650 = vadd.f32 0.0, %v649
        %v651 = vpop.f32.mrf.mxu0
        %v652 = vadd.f32 0.0, %v651
        %v653 = vpop.f32.mrf.mxu0
        %v654 = vadd.f32 0.0, %v653
        %v655 = vpop.f32.mrf.mxu0
        %v656 = vadd.f32 0.0, %v655
        %657 = vmatprep.mubr.bf16.mxu0 0
        %658 = vmatmul.mubr.bf16.gmra.mxu0 %v595
        %v659 = vpop.f32.mrf.mxu0
        %v660 = vadd.f32 0.0, %v659
        %v661 = vpop.f32.mrf.mxu0
        %v662 = vadd.f32 0.0, %v661
        %v663 = vpop.f32.mrf.mxu0
        %v664 = vadd.f32 0.0, %v663
        %v665 = vpop.f32.mrf.mxu0
        %v666 = vadd.f32 0.0, %v665
        %667 = vmatprep.mubr.bf16.mxu0 0
        %668 = vmatmul.mubr.bf16.gmra.mxu0 %v598
        %v669 = vpop.f32.mrf.mxu0
        %v670 = vadd.f32 0.0, %v669
        %v671 = vpop.f32.mrf.mxu0
        %v672 = vadd.f32 0.0, %v671
        %v673 = vpop.f32.mrf.mxu0
        %v674 = vadd.f32 0.0, %v673
        %v675 = vpop.f32.mrf.mxu0
        %v676 = vadd.f32 0.0, %v675
        %677 = vmatprep.mubr.bf16.mxu0 0
        %678 = vmatmul.mubr.bf16.gmra.mxu0 %v601
        %v679 = vpop.f32.mrf.mxu0
        %v680 = vadd.f32 0.0, %v679
        %v681 = vpop.f32.mrf.mxu0
        %v682 = vadd.f32 0.0, %v681
        %v683 = vpop.f32.mrf.mxu0
        %v684 = vadd.f32 0.0, %v683
        %v685 = vpop.f32.mrf.mxu0
        %v686 = vadd.f32 0.0, %v685
        %687 = vmatprep.mubr.bf16.mxu0 0
        %688 = vmatmul.mubr.bf16.gmra.mxu0 %v604
        %v689 = vpop.f32.mrf.mxu0
        %v690 = vadd.f32 0.0, %v689
        %v691 = vpop.f32.mrf.mxu0
        %v692 = vadd.f32 0.0, %v691
        %v693 = vpop.f32.mrf.mxu0
        %v694 = vadd.f32 0.0, %v693
        %v695 = vpop.f32.mrf.mxu0
        %v696 = vadd.f32 0.0, %v695
        %697 = vmatprep.mubr.bf16.mxu0 0
        %698 = vmatmul.mubr.bf16.gmra.mxu0 %v607
        %v699 = vpop.f32.mrf.mxu0
        %v700 = vadd.f32 0.0, %v699
        %v701 = vpop.f32.mrf.mxu0
        %v702 = vadd.f32 0.0, %v701
        %v703 = vpop.f32.mrf.mxu0
        %v704 = vadd.f32 0.0, %v703
        %v705 = vpop.f32.mrf.mxu0
        %v706 = vadd.f32 0.0, %v705
        %707 = vmatprep.mubr.bf16.mxu0 0
        %708 = vmatmul.mubr.bf16.gmra.mxu0 %v610
        %v709 = vpop.f32.mrf.mxu0
        %v710 = vadd.f32 0.0, %v709
        %v711 = vpop.f32.mrf.mxu0
        %v712 = vadd.f32 0.0, %v711
        %v713 = vpop.f32.mrf.mxu0
        %v714 = vadd.f32 0.0, %v713
        %v715 = vpop.f32.mrf.mxu0
        %v716 = vadd.f32 0.0, %v715
        %717 = vmatprep.mubr.bf16.mxu0 0
        %718 = vmatmul.mubr.bf16.gmra.mxu0 %v613
        %v719 = vpop.f32.mrf.mxu0
        %v720 = vadd.f32 0.0, %v719
        %v721 = vpop.f32.mrf.mxu0
        %v722 = vadd.f32 0.0, %v721
        %v723 = vpop.f32.mrf.mxu0
        %v724 = vadd.f32 0.0, %v723
        %v725 = vpop.f32.mrf.mxu0
        %v726 = vadd.f32 0.0, %v725
        %727 = vdwg.mxu0
        %728 = vmatprep.subr.bf16.mxu0 0
        %729 = vmatpush1.bf16.msra.mxu0 0
        %730 = vmatprep.subr.bf16.mxu0 0
        %731 = vmatpush1.bf16.msra.mxu0 0
        %732 = vmatprep.subr.bf16.mxu0 0
        %733 = vmatpush1.bf16.msra.mxu0 0
        %734 = vmatprep.subr.bf16.mxu0 0
        %735 = vmatpush1.bf16.msra.mxu0 0
        %736 = vmatprep.subr.bf16.mxu0 0
        %737 = vmatpush1.bf16.msra.mxu0 0
        %738 = vmatprep.subr.bf16.mxu0 0
        %739 = vmatpush1.bf16.msra.mxu0 0
        %740 = vmatprep.subr.bf16.mxu0 0
        %741 = vmatpush1.bf16.msra.mxu0 %v583
        %742 = vmatprep.subr.bf16.mxu0 0
        %743 = vmatpush1.bf16.msra.mxu0 %v580
        %744 = vmatprep.subr.bf16.mxu0 0
        %745 = vmatpush2.bf16.msra.mxu0 0
        %746 = vmatprep.subr.bf16.mxu0 0
        %747 = vmatpush2.bf16.msra.mxu0 0
        %748 = vmatprep.subr.bf16.mxu0 0
        %749 = vmatpush2.bf16.msra.mxu0 0
        %750 = vmatprep.subr.bf16.mxu0 0
        %751 = vmatpush2.bf16.msra.mxu0 0
        %752 = vmatprep.subr.bf16.mxu0 0
        %753 = vmatpush2.bf16.msra.mxu0 0
        %754 = vmatprep.subr.bf16.mxu0 0
        %755 = vmatpush2.bf16.msra.mxu0 0
        %756 = vmatprep.subr.bf16.mxu0 0
        %757 = vmatpush2.bf16.msra.mxu0 0
        %758 = vmatprep.subr.bf16.mxu0 0
        %759 = vmatpush2.bf16.msra.mxu0 0
        %760 = vmatprep.mubr.bf16.mxu0 0
        %761 = vmatmul.mubr.bf16.gmra.mxu0 %v592
        %v762 = vpop.f32.mrf.mxu0
        %v763 = vadd.f32 0.0, %v762
        %v764 = vpop.f32.mrf.mxu0
        %v765 = vpop.f32.mrf.mxu0
        %v766 = vadd.f32 0.0, %v765
        %v767 = vpop.f32.mrf.mxu0
        %768 = vmatprep.mubr.bf16.mxu0 0
        %769 = vmatmul.mubr.bf16.gmra.mxu0 %v595
        %v770 = vpop.f32.mrf.mxu0
        %v771 = vadd.f32 0.0, %v770
        %v772 = vpop.f32.mrf.mxu0
        %v773 = vpop.f32.mrf.mxu0
        %v774 = vadd.f32 0.0, %v773
        %v775 = vpop.f32.mrf.mxu0
        %776 = vmatprep.mubr.bf16.mxu0 0
        %777 = vmatmul.mubr.bf16.gmra.mxu0 %v598
        %v778 = vpop.f32.mrf.mxu0
        %v779 = vadd.f32 0.0, %v778
        %v780 = vpop.f32.mrf.mxu0
        %v781 = vpop.f32.mrf.mxu0
        %v782 = vadd.f32 0.0, %v781
        %v783 = vpop.f32.mrf.mxu0
        %784 = vmatprep.mubr.bf16.mxu0 0
        %785 = vmatmul.mubr.bf16.gmra.mxu0 %v601
        %v786 = vpop.f32.mrf.mxu0
        %v787 = vadd.f32 0.0, %v786
        %v788 = vpop.f32.mrf.mxu0
        %v789 = vpop.f32.mrf.mxu0
        %v790 = vadd.f32 0.0, %v789
        %v791 = vpop.f32.mrf.mxu0
        %792 = vmatprep.mubr.bf16.mxu0 0
        %793 = vmatmul.mubr.bf16.gmra.mxu0 %v604
        %v794 = vpop.f32.mrf.mxu0
        %v795 = vadd.f32 0.0, %v794
        %v796 = vpop.f32.mrf.mxu0
        %v797 = vpop.f32.mrf.mxu0
        %v798 = vadd.f32 0.0, %v797
        %v799 = vpop.f32.mrf.mxu0
        %800 = vmatprep.mubr.bf16.mxu0 0
        %801 = vmatmul.mubr.bf16.gmra.mxu0 %v607
        %v802 = vpop.f32.mrf.mxu0
        %v803 = vadd.f32 0.0, %v802
        %v804 = vpop.f32.mrf.mxu0
        %v805 = vpop.f32.mrf.mxu0
        %v806 = vadd.f32 0.0, %v805
        %v807 = vpop.f32.mrf.mxu0
        %808 = vmatprep.mubr.bf16.mxu0 0
        %809 = vmatmul.mubr.bf16.gmra.mxu0 %v610
        %v810 = vpop.f32.mrf.mxu0
        %v811 = vadd.f32 0.0, %v810
        %v812 = vpop.f32.mrf.mxu0
        %v813 = vpop.f32.mrf.mxu0
        %v814 = vadd.f32 0.0, %v813
        %v815 = vpop.f32.mrf.mxu0
        %816 = vmatprep.mubr.bf16.mxu0 0
        %817 = vmatmul.mubr.bf16.gmra.mxu0 %v613
        %v818 = vpop.f32.mrf.mxu0
        %v819 = vadd.f32 0.0, %v818
        %v820 = vpop.f32.mrf.mxu0
        %v821 = vpop.f32.mrf.mxu0
        %v822 = vadd.f32 0.0, %v821
        %v823 = vpop.f32.mrf.mxu0
        %824 = vdwg.mxu0
        %v841 = vunpack.c.l.b16 %v298
        %v842 = vunpack.c.l.b16 %v299
        %v843 = vunpack.c.l.b16 %v301
        %v844 = vunpack.c.l.b16 %v302
        %v845 = vunpack.c.l.b16 %v304
        %v846 = vunpack.c.l.b16 %v305
        %v847 = vunpack.c.l.b16 %v307
        %v848 = vunpack.c.l.b16 %v308
        %v849 = vunpack.c.l.b16 %v310
        %v850 = vunpack.c.l.b16 %v311
        %v851 = vunpack.c.l.b16 %v313
        %v852 = vunpack.c.l.b16 %v314
        %v853 = vunpack.c.l.b16 %v316
        %v854 = vunpack.c.l.b16 %v317
        %v855 = vunpack.c.l.b16 %v319
        %v856 = vunpack.c.l.b16 %v320
        %v857 = vpack.c.b16 %v842, %v841
        %v858 = vpack.c.b16 %v844, %v843
        %v859 = vpack.c.b16 %v846, %v845
        %v860 = vpack.c.b16 %v848, %v847
        %v861 = vpack.c.b16 %v850, %v849
        %v862 = vpack.c.b16 %v852, %v851
        %v863 = vpack.c.b16 %v854, %v853
        %v864 = vpack.c.b16 %v856, %v855
        %v873 = vunpack.c.l.b16 %v322
        %v874 = vunpack.c.h.b16 %v322
        %v875 = vunpack.c.l.b16 %v323
        %v876 = vunpack.c.l.b16 %v324
        %v877 = vunpack.c.h.b16 %v324
        %v878 = vunpack.c.l.b16 %v325
        %v879 = vunpack.c.l.b16 %v326
        %v880 = vunpack.c.h.b16 %v326
        %v881 = vunpack.c.l.b16 %v327
        %v882 = vunpack.c.l.b16 %v328
        %v883 = vunpack.c.h.b16 %v328
        %v884 = vunpack.c.l.b16 %v329
        %v885 = vpack.c.b16 %v876, %v873
        %v886 = vpack.c.b16 %v877, %v874
        %v887 = vpack.c.b16 %v878, %v875
        %v888 = vpack.c.b16 %v882, %v879
        %v889 = vpack.c.b16 %v883, %v880
        %v890 = vpack.c.b16 %v884, %v881
        %v898 = vsel %vm590, %v857, 0
        %v901 = vsel %vm590, %v858, 0
        %v904 = vsel %vm590, %v859, 0
        %v907 = vsel %vm590, %v860, 0
        %v910 = vsel %vm590, %v861, 0
        %v913 = vsel %vm590, %v862, 0
        %v916 = vsel %vm590, %v863, 0
        %v919 = vsel %vm590, %v864, 0
        %921 = vmatprep.subr.bf16.mxu0 0
        %922 = vmatpush1.bf16.msra.mxu0 0
        %923 = vmatprep.subr.bf16.mxu0 0
        %924 = vmatpush1.bf16.msra.mxu0 0
        %925 = vmatprep.subr.bf16.mxu0 0
        %926 = vmatpush1.bf16.msra.mxu0 0
        %927 = vmatprep.subr.bf16.mxu0 0
        %928 = vmatpush1.bf16.msra.mxu0 0
        %929 = vmatprep.subr.bf16.mxu0 0
        %930 = vmatpush1.bf16.msra.mxu0 0
        %931 = vmatprep.subr.bf16.mxu0 0
        %932 = vmatpush1.bf16.msra.mxu0 0
        %933 = vmatprep.subr.bf16.mxu0 %v889
        %934 = vmatpush1.bf16.msra.mxu0 %v888
        %935 = vmatprep.subr.bf16.mxu0 %v886
        %936 = vmatpush1.bf16.msra.mxu0 %v885
        %937 = vmatprep.subr.bf16.mxu0 0
        %938 = vmatpush2.bf16.msra.mxu0 0
        %939 = vmatprep.subr.bf16.mxu0 0
        %940 = vmatpush2.bf16.msra.mxu0 0
        %941 = vmatprep.subr.bf16.mxu0 0
        %942 = vmatpush2.bf16.msra.mxu0 0
        %943 = vmatprep.subr.bf16.mxu0 0
        %944 = vmatpush2.bf16.msra.mxu0 0
        %945 = vmatprep.subr.bf16.mxu0 0
        %946 = vmatpush2.bf16.msra.mxu0 0
        %947 = vmatprep.subr.bf16.mxu0 0
        %948 = vmatpush2.bf16.msra.mxu0 0
        %949 = vmatprep.subr.bf16.mxu0 0
        %950 = vmatpush2.bf16.msra.mxu0 0
        %951 = vmatprep.subr.bf16.mxu0 0
        %952 = vmatpush2.bf16.msra.mxu0 0
        %953 = vmatprep.mubr.bf16.mxu0 0
        %954 = vmatmul.mubr.bf16.gmra.mxu0 %v898
        %v955 = vpop.f32.mrf.mxu0
        %v956 = vadd.f32 %v650, %v955
        %v957 = vpop.f32.mrf.mxu0
        %v958 = vadd.f32 %v652, %v957
        %v959 = vpop.f32.mrf.mxu0
        %v960 = vadd.f32 %v654, %v959
        %v961 = vpop.f32.mrf.mxu0
        %v962 = vadd.f32 %v656, %v961
        %963 = vmatprep.mubr.bf16.mxu0 0
        %964 = vmatmul.mubr.bf16.gmra.mxu0 %v901
        %v965 = vpop.f32.mrf.mxu0
        %v966 = vadd.f32 %v660, %v965
        %v967 = vpop.f32.mrf.mxu0
        %v968 = vadd.f32 %v662, %v967
        %v969 = vpop.f32.mrf.mxu0
        %v970 = vadd.f32 %v664, %v969
        %v971 = vpop.f32.mrf.mxu0
        %v972 = vadd.f32 %v666, %v971
        %973 = vmatprep.mubr.bf16.mxu0 0
        %974 = vmatmul.mubr.bf16.gmra.mxu0 %v904
        %v975 = vpop.f32.mrf.mxu0
        %v976 = vadd.f32 %v670, %v975
        %v977 = vpop.f32.mrf.mxu0
        %v978 = vadd.f32 %v672, %v977
        %v979 = vpop.f32.mrf.mxu0
        %v980 = vadd.f32 %v674, %v979
        %v981 = vpop.f32.mrf.mxu0
        %v982 = vadd.f32 %v676, %v981
        %983 = vmatprep.mubr.bf16.mxu0 0
        %984 = vmatmul.mubr.bf16.gmra.mxu0 %v907
        %v985 = vpop.f32.mrf.mxu0
        %v986 = vadd.f32 %v680, %v985
        %v987 = vpop.f32.mrf.mxu0
        %v988 = vadd.f32 %v682, %v987
        %v989 = vpop.f32.mrf.mxu0
        %v990 = vadd.f32 %v684, %v989
        %v991 = vpop.f32.mrf.mxu0
        %v992 = vadd.f32 %v686, %v991
        %993 = vmatprep.mubr.bf16.mxu0 0
        %994 = vmatmul.mubr.bf16.gmra.mxu0 %v910
        %v995 = vpop.f32.mrf.mxu0
        %v996 = vadd.f32 %v690, %v995
        %v997 = vpop.f32.mrf.mxu0
        %v998 = vadd.f32 %v692, %v997
        %v999 = vpop.f32.mrf.mxu0
        %v1000 = vadd.f32 %v694, %v999
        %v1001 = vpop.f32.mrf.mxu0
        %v1002 = vadd.f32 %v696, %v1001
        %1003 = vmatprep.mubr.bf16.mxu0 0
        %1004 = vmatmul.mubr.bf16.gmra.mxu0 %v913
        %v1005 = vpop.f32.mrf.mxu0
        %v1006 = vadd.f32 %v700, %v1005
        %v1007 = vpop.f32.mrf.mxu0
        %v1008 = vadd.f32 %v702, %v1007
        %v1009 = vpop.f32.mrf.mxu0
        %v1010 = vadd.f32 %v704, %v1009
        %v1011 = vpop.f32.mrf.mxu0
        %v1012 = vadd.f32 %v706, %v1011
        %1013 = vmatprep.mubr.bf16.mxu0 0
        %1014 = vmatmul.mubr.bf16.gmra.mxu0 %v916
        %v1015 = vpop.f32.mrf.mxu0
        %v1016 = vadd.f32 %v710, %v1015
        %v1017 = vpop.f32.mrf.mxu0
        %v1018 = vadd.f32 %v712, %v1017
        %v1019 = vpop.f32.mrf.mxu0
        %v1020 = vadd.f32 %v714, %v1019
        %v1021 = vpop.f32.mrf.mxu0
        %v1022 = vadd.f32 %v716, %v1021
        %1023 = vmatprep.mubr.bf16.mxu0 0
        %1024 = vmatmul.mubr.bf16.gmra.mxu0 %v919
        %v1025 = vpop.f32.mrf.mxu0
        %v1026 = vadd.f32 %v720, %v1025
        %v1027 = vpop.f32.mrf.mxu0
        %v1028 = vadd.f32 %v722, %v1027
        %v1029 = vpop.f32.mrf.mxu0
        %v1030 = vadd.f32 %v724, %v1029
        %v1031 = vpop.f32.mrf.mxu0
        %v1032 = vadd.f32 %v726, %v1031
        %1033 = vdwg.mxu0
        %1034 = vmatprep.subr.bf16.mxu0 0
        %1035 = vmatpush1.bf16.msra.mxu0 0
        %1036 = vmatprep.subr.bf16.mxu0 0
        %1037 = vmatpush1.bf16.msra.mxu0 0
        %1038 = vmatprep.subr.bf16.mxu0 0
        %1039 = vmatpush1.bf16.msra.mxu0 0
        %1040 = vmatprep.subr.bf16.mxu0 0
        %1041 = vmatpush1.bf16.msra.mxu0 0
        %1042 = vmatprep.subr.bf16.mxu0 0
        %1043 = vmatpush1.bf16.msra.mxu0 0
        %1044 = vmatprep.subr.bf16.mxu0 0
        %1045 = vmatpush1.bf16.msra.mxu0 0
        %1046 = vmatprep.subr.bf16.mxu0 0
        %1047 = vmatpush1.bf16.msra.mxu0 %v890
        %1048 = vmatprep.subr.bf16.mxu0 0
        %1049 = vmatpush1.bf16.msra.mxu0 %v887
        %1050 = vmatprep.subr.bf16.mxu0 0
        %1051 = vmatpush2.bf16.msra.mxu0 0
        %1052 = vmatprep.subr.bf16.mxu0 0
        %1053 = vmatpush2.bf16.msra.mxu0 0
        %1054 = vmatprep.subr.bf16.mxu0 0
        %1055 = vmatpush2.bf16.msra.mxu0 0
        %1056 = vmatprep.subr.bf16.mxu0 0
        %1057 = vmatpush2.bf16.msra.mxu0 0
        %1058 = vmatprep.subr.bf16.mxu0 0
        %1059 = vmatpush2.bf16.msra.mxu0 0
        %1060 = vmatprep.subr.bf16.mxu0 0
        %1061 = vmatpush2.bf16.msra.mxu0 0
        %1062 = vmatprep.subr.bf16.mxu0 0
        %1063 = vmatpush2.bf16.msra.mxu0 0
        %1064 = vmatprep.subr.bf16.mxu0 0
        %1065 = vmatpush2.bf16.msra.mxu0 0
        %1066 = vmatprep.mubr.bf16.mxu0 0
        %1067 = vmatmul.mubr.bf16.gmra.mxu0 %v898
        %v1068 = vpop.f32.mrf.mxu0
        %v1069 = vadd.f32 %v763, %v1068
        %v1070 = vpop.f32.mrf.mxu0
        %v1071 = vpop.f32.mrf.mxu0
        %v1072 = vadd.f32 %v766, %v1071
        %v1073 = vpop.f32.mrf.mxu0
        %1074 = vmatprep.mubr.bf16.mxu0 0
        %1075 = vmatmul.mubr.bf16.gmra.mxu0 %v901
        %v1076 = vpop.f32.mrf.mxu0
        %v1077 = vadd.f32 %v771, %v1076
        %v1078 = vpop.f32.mrf.mxu0
        %v1079 = vpop.f32.mrf.mxu0
        %v1080 = vadd.f32 %v774, %v1079
        %v1081 = vpop.f32.mrf.mxu0
        %1082 = vmatprep.mubr.bf16.mxu0 0
        %1083 = vmatmul.mubr.bf16.gmra.mxu0 %v904
        %v1084 = vpop.f32.mrf.mxu0
        %v1085 = vadd.f32 %v779, %v1084
        %v1086 = vpop.f32.mrf.mxu0
        %v1087 = vpop.f32.mrf.mxu0
        %v1088 = vadd.f32 %v782, %v1087
        %v1089 = vpop.f32.mrf.mxu0
        %1090 = vmatprep.mubr.bf16.mxu0 0
        %1091 = vmatmul.mubr.bf16.gmra.mxu0 %v907
        %v1092 = vpop.f32.mrf.mxu0
        %v1093 = vadd.f32 %v787, %v1092
        %v1094 = vpop.f32.mrf.mxu0
        %v1095 = vpop.f32.mrf.mxu0
        %v1096 = vadd.f32 %v790, %v1095
        %v1097 = vpop.f32.mrf.mxu0
        %1098 = vmatprep.mubr.bf16.mxu0 0
        %1099 = vmatmul.mubr.bf16.gmra.mxu0 %v910
        %v1100 = vpop.f32.mrf.mxu0
        %v1101 = vadd.f32 %v795, %v1100
        %v1102 = vpop.f32.mrf.mxu0
        %v1103 = vpop.f32.mrf.mxu0
        %v1104 = vadd.f32 %v798, %v1103
        %v1105 = vpop.f32.mrf.mxu0
        %1106 = vmatprep.mubr.bf16.mxu0 0
        %1107 = vmatmul.mubr.bf16.gmra.mxu0 %v913
        %v1108 = vpop.f32.mrf.mxu0
        %v1109 = vadd.f32 %v803, %v1108
        %v1110 = vpop.f32.mrf.mxu0
        %v1111 = vpop.f32.mrf.mxu0
        %v1112 = vadd.f32 %v806, %v1111
        %v1113 = vpop.f32.mrf.mxu0
        %1114 = vmatprep.mubr.bf16.mxu0 0
        %1115 = vmatmul.mubr.bf16.gmra.mxu0 %v916
        %v1116 = vpop.f32.mrf.mxu0
        %v1117 = vadd.f32 %v811, %v1116
        %v1118 = vpop.f32.mrf.mxu0
        %v1119 = vpop.f32.mrf.mxu0
        %v1120 = vadd.f32 %v814, %v1119
        %v1121 = vpop.f32.mrf.mxu0
        %1122 = vmatprep.mubr.bf16.mxu0 0
        %1123 = vmatmul.mubr.bf16.gmra.mxu0 %v919
        %v1124 = vpop.f32.mrf.mxu0
        %v1125 = vadd.f32 %v819, %v1124
        %v1126 = vpop.f32.mrf.mxu0
        %v1127 = vpop.f32.mrf.mxu0
        %v1128 = vadd.f32 %v822, %v1127
        %v1129 = vpop.f32.mrf.mxu0
        %1130 = vdwg.mxu0
        %vm1139 = vcmask 1042432
        %vm1140 = vcmask 1046532
        %vm1141 = vmor %vm1139, %vm1140
        %v1142 = vrot.slane %v298, 5
        %v1143 = vrot.slane %v1142, 4
        %v1144 = vrot.slane %v299, 5
        %v1145 = vsel %vm1141, %v1143, %v1144
        %v1146 = vrot.slane %v1144, 4
        %v1147 = vrot.slane %v300, 5
        %v1148 = vsel %vm1141, %v1146, %v1147
        %v1149 = vrot.slane %v301, 5
        %v1150 = vrot.slane %v1149, 4
        %v1151 = vrot.slane %v302, 5
        %v1152 = vsel %vm1141, %v1150, %v1151
        %v1153 = vrot.slane %v1151, 4
        %v1154 = vrot.slane %v303, 5
        %v1155 = vsel %vm1141, %v1153, %v1154
        %v1156 = vrot.slane %v304, 5
        %v1157 = vrot.slane %v1156, 4
        %v1158 = vrot.slane %v305, 5
        %v1159 = vsel %vm1141, %v1157, %v1158
        %v1160 = vrot.slane %v1158, 4
        %v1161 = vrot.slane %v306, 5
        %v1162 = vsel %vm1141, %v1160, %v1161
        %v1163 = vrot.slane %v307, 5
        %v1164 = vrot.slane %v1163, 4
        %v1165 = vrot.slane %v308, 5
        %v1166 = vsel %vm1141, %v1164, %v1165
        %v1167 = vrot.slane %v1165, 4
        %v1168 = vrot.slane %v309, 5
        %v1169 = vsel %vm1141, %v1167, %v1168
        %v1170 = vrot.slane %v310, 5
        %v1171 = vrot.slane %v1170, 4
        %v1172 = vrot.slane %v311, 5
        %v1173 = vsel %vm1141, %v1171, %v1172
        %v1174 = vrot.slane %v1172, 4
        %v1175 = vrot.slane %v312, 5
        %v1176 = vsel %vm1141, %v1174, %v1175
        %v1177 = vrot.slane %v313, 5
        %v1178 = vrot.slane %v1177, 4
        %v1179 = vrot.slane %v314, 5
        %v1180 = vsel %vm1141, %v1178, %v1179
        %v1181 = vrot.slane %v1179, 4
        %v1182 = vrot.slane %v315, 5
        %v1183 = vsel %vm1141, %v1181, %v1182
        %v1184 = vrot.slane %v316, 5
        %v1185 = vrot.slane %v1184, 4
        %v1186 = vrot.slane %v317, 5
        %v1187 = vsel %vm1141, %v1185, %v1186
        %v1188 = vrot.slane %v1186, 4
        %v1189 = vrot.slane %v318, 5
        %v1190 = vsel %vm1141, %v1188, %v1189
        %v1191 = vrot.slane %v319, 5
        %v1192 = vrot.slane %v1191, 4
        %v1193 = vrot.slane %v320, 5
        %v1194 = vsel %vm1141, %v1192, %v1193
        %v1195 = vrot.slane %v1193, 4
        %v1196 = vrot.slane %v321, 5
        %v1197 = vsel %vm1141, %v1195, %v1196
        %s1198 = scalar_lea.vmem %s1, 96
        %v1199 = vld [vmem:[%s1198] sm:$0xff]
        %v1200 = vld [vmem:[%s1198 + $0x8] sm:$0xf]
        %v1201 = vld [vmem:[%s1198 + $0xc] sm:$0xff]
        %v1202 = vld [vmem:[%s1198 + $0x14] sm:$0xf]
        %v1203 = vld [vmem:[%s1198 + $0x18] sm:$0xff]
        %v1204 = vld [vmem:[%s1198 + $0x20] sm:$0xf]
        %v1205 = vld [vmem:[%s1198 + $0x24] sm:$0xff]
        %v1206 = vld [vmem:[%s1198 + $0x2c] sm:$0xf]
        %v1207 = vunpack.c.l.b16 %v1145
        %v1208 = vunpack.c.l.b16 %v1148
        %v1209 = vunpack.c.l.b16 %v1152
        %v1210 = vunpack.c.l.b16 %v1155
        %v1211 = vunpack.c.l.b16 %v1159
        %v1212 = vunpack.c.l.b16 %v1162
        %v1213 = vunpack.c.l.b16 %v1166
        %v1214 = vunpack.c.l.b16 %v1169
        %v1215 = vunpack.c.l.b16 %v1173
        %v1216 = vunpack.c.l.b16 %v1176
        %v1217 = vunpack.c.l.b16 %v1180
        %v1218 = vunpack.c.l.b16 %v1183
        %v1219 = vunpack.c.l.b16 %v1187
        %v1220 = vunpack.c.l.b16 %v1190
        %v1221 = vunpack.c.l.b16 %v1194
        %v1222 = vunpack.c.l.b16 %v1197
        %v1223 = vpack.c.b16 %v1208, %v1207
        %v1224 = vpack.c.b16 %v1210, %v1209
        %v1225 = vpack.c.b16 %v1212, %v1211
        %v1226 = vpack.c.b16 %v1214, %v1213
        %v1227 = vpack.c.b16 %v1216, %v1215
        %v1228 = vpack.c.b16 %v1218, %v1217
        %v1229 = vpack.c.b16 %v1220, %v1219
        %v1230 = vpack.c.b16 %v1222, %v1221
        %v1239 = vunpack.c.l.b16 %v1199
        %v1240 = vunpack.c.h.b16 %v1199
        %v1241 = vunpack.c.l.b16 %v1200
        %v1242 = vunpack.c.l.b16 %v1201
        %v1243 = vunpack.c.h.b16 %v1201
        %v1244 = vunpack.c.l.b16 %v1202
        %v1245 = vunpack.c.l.b16 %v1203
        %v1246 = vunpack.c.h.b16 %v1203
        %v1247 = vunpack.c.l.b16 %v1204
        %v1248 = vunpack.c.l.b16 %v1205
        %v1249 = vunpack.c.h.b16 %v1205
        %v1250 = vunpack.c.l.b16 %v1206
        %v1251 = vpack.c.b16 %v1242, %v1239
        %v1252 = vpack.c.b16 %v1243, %v1240
        %v1253 = vpack.c.b16 %v1244, %v1241
        %v1254 = vpack.c.b16 %v1248, %v1245
        %v1255 = vpack.c.b16 %v1249, %v1246
        %v1256 = vpack.c.b16 %v1250, %v1247
        %v1264 = vsel %vm590, %v1223, 0
        %v1267 = vsel %vm590, %v1224, 0
        %v1270 = vsel %vm590, %v1225, 0
        %v1273 = vsel %vm590, %v1226, 0
        %v1276 = vsel %vm590, %v1227, 0
        %v1279 = vsel %vm590, %v1228, 0
        %v1282 = vsel %vm590, %v1229, 0
        %v1285 = vsel %vm590, %v1230, 0
        %1287 = vmatprep.subr.bf16.mxu0 0
        %1288 = vmatpush1.bf16.msra.mxu0 0
        %1289 = vmatprep.subr.bf16.mxu0 0
        %1290 = vmatpush1.bf16.msra.mxu0 0
        %1291 = vmatprep.subr.bf16.mxu0 0
        %1292 = vmatpush1.bf16.msra.mxu0 0
        %1293 = vmatprep.subr.bf16.mxu0 0
        %1294 = vmatpush1.bf16.msra.mxu0 0
        %1295 = vmatprep.subr.bf16.mxu0 0
        %1296 = vmatpush1.bf16.msra.mxu0 0
        %1297 = vmatprep.subr.bf16.mxu0 0
        %1298 = vmatpush1.bf16.msra.mxu0 0
        %1299 = vmatprep.subr.bf16.mxu0 %v1255
        %1300 = vmatpush1.bf16.msra.mxu0 %v1254
        %1301 = vmatprep.subr.bf16.mxu0 %v1252
        %1302 = vmatpush1.bf16.msra.mxu0 %v1251
        %1303 = vmatprep.subr.bf16.mxu0 0
        %1304 = vmatpush2.bf16.msra.mxu0 0
        %1305 = vmatprep.subr.bf16.mxu0 0
        %1306 = vmatpush2.bf16.msra.mxu0 0
        %1307 = vmatprep.subr.bf16.mxu0 0
        %1308 = vmatpush2.bf16.msra.mxu0 0
        %1309 = vmatprep.subr.bf16.mxu0 0
        %1310 = vmatpush2.bf16.msra.mxu0 0
        %1311 = vmatprep.subr.bf16.mxu0 0
        %1312 = vmatpush2.bf16.msra.mxu0 0
        %1313 = vmatprep.subr.bf16.mxu0 0
        %1314 = vmatpush2.bf16.msra.mxu0 0
        %1315 = vmatprep.subr.bf16.mxu0 0
        %1316 = vmatpush2.bf16.msra.mxu0 0
        %1317 = vmatprep.subr.bf16.mxu0 0
        %1318 = vmatpush2.bf16.msra.mxu0 0
        %1319 = vmatprep.mubr.bf16.mxu0 0
        %1320 = vmatmul.mubr.bf16.gmra.mxu0 %v1264
        %v1321 = vpop.f32.mrf.mxu0
        %v1322 = vadd.f32 0.0, %v1321
        %v1323 = vpop.f32.mrf.mxu0
        %v1324 = vadd.f32 0.0, %v1323
        %v1325 = vpop.f32.mrf.mxu0
        %v1326 = vadd.f32 0.0, %v1325
        %v1327 = vpop.f32.mrf.mxu0
        %v1328 = vadd.f32 0.0, %v1327
        %1329 = vmatprep.mubr.bf16.mxu0 0
        %1330 = vmatmul.mubr.bf16.gmra.mxu0 %v1267
        %v1331 = vpop.f32.mrf.mxu0
        %v1332 = vadd.f32 0.0, %v1331
        %v1333 = vpop.f32.mrf.mxu0
        %v1334 = vadd.f32 0.0, %v1333
        %v1335 = vpop.f32.mrf.mxu0
        %v1336 = vadd.f32 0.0, %v1335
        %v1337 = vpop.f32.mrf.mxu0
        %v1338 = vadd.f32 0.0, %v1337
        %1339 = vmatprep.mubr.bf16.mxu0 0
        %1340 = vmatmul.mubr.bf16.gmra.mxu0 %v1270
        %v1341 = vpop.f32.mrf.mxu0
        %v1342 = vadd.f32 0.0, %v1341
        %v1343 = vpop.f32.mrf.mxu0
        %v1344 = vadd.f32 0.0, %v1343
        %v1345 = vpop.f32.mrf.mxu0
        %v1346 = vadd.f32 0.0, %v1345
        %v1347 = vpop.f32.mrf.mxu0
        %v1348 = vadd.f32 0.0, %v1347
        %1349 = vmatprep.mubr.bf16.mxu0 0
        %1350 = vmatmul.mubr.bf16.gmra.mxu0 %v1273
        %v1351 = vpop.f32.mrf.mxu0
        %v1352 = vadd.f32 0.0, %v1351
        %v1353 = vpop.f32.mrf.mxu0
        %v1354 = vadd.f32 0.0, %v1353
        %v1355 = vpop.f32.mrf.mxu0
        %v1356 = vadd.f32 0.0, %v1355
        %v1357 = vpop.f32.mrf.mxu0
        %v1358 = vadd.f32 0.0, %v1357
        %1359 = vmatprep.mubr.bf16.mxu0 0
        %1360 = vmatmul.mubr.bf16.gmra.mxu0 %v1276
        %v1361 = vpop.f32.mrf.mxu0
        %v1362 = vadd.f32 0.0, %v1361
        %v1363 = vpop.f32.mrf.mxu0
        %v1364 = vadd.f32 0.0, %v1363
        %v1365 = vpop.f32.mrf.mxu0
        %v1366 = vadd.f32 0.0, %v1365
        %v1367 = vpop.f32.mrf.mxu0
        %v1368 = vadd.f32 0.0, %v1367
        %1369 = vmatprep.mubr.bf16.mxu0 0
        %1370 = vmatmul.mubr.bf16.gmra.mxu0 %v1279
        %v1371 = vpop.f32.mrf.mxu0
        %v1372 = vadd.f32 0.0, %v1371
        %v1373 = vpop.f32.mrf.mxu0
        %v1374 = vadd.f32 0.0, %v1373
        %v1375 = vpop.f32.mrf.mxu0
        %v1376 = vadd.f32 0.0, %v1375
        %v1377 = vpop.f32.mrf.mxu0
        %v1378 = vadd.f32 0.0, %v1377
        %1379 = vmatprep.mubr.bf16.mxu0 0
        %1380 = vmatmul.mubr.bf16.gmra.mxu0 %v1282
        %v1381 = vpop.f32.mrf.mxu0
        %v1382 = vadd.f32 0.0, %v1381
        %v1383 = vpop.f32.mrf.mxu0
        %v1384 = vadd.f32 0.0, %v1383
        %v1385 = vpop.f32.mrf.mxu0
        %v1386 = vadd.f32 0.0, %v1385
        %v1387 = vpop.f32.mrf.mxu0
        %v1388 = vadd.f32 0.0, %v1387
        %1389 = vmatprep.mubr.bf16.mxu0 0
        %1390 = vmatmul.mubr.bf16.gmra.mxu0 %v1285
        %v1391 = vpop.f32.mrf.mxu0
        %v1392 = vadd.f32 0.0, %v1391
        %v1393 = vpop.f32.mrf.mxu0
        %v1394 = vadd.f32 0.0, %v1393
        %v1395 = vpop.f32.mrf.mxu0
        %v1396 = vadd.f32 0.0, %v1395
        %v1397 = vpop.f32.mrf.mxu0
        %v1398 = vadd.f32 0.0, %v1397
        %1399 = vdwg.mxu0
        %1400 = vmatprep.subr.bf16.mxu0 0
        %1401 = vmatpush1.bf16.msra.mxu0 0
        %1402 = vmatprep.subr.bf16.mxu0 0
        %1403 = vmatpush1.bf16.msra.mxu0 0
        %1404 = vmatprep.subr.bf16.mxu0 0
        %1405 = vmatpush1.bf16.msra.mxu0 0
        %1406 = vmatprep.subr.bf16.mxu0 0
        %1407 = vmatpush1.bf16.msra.mxu0 0
        %1408 = vmatprep.subr.bf16.mxu0 0
        %1409 = vmatpush1.bf16.msra.mxu0 0
        %1410 = vmatprep.subr.bf16.mxu0 0
        %1411 = vmatpush1.bf16.msra.mxu0 0
        %1412 = vmatprep.subr.bf16.mxu0 0
        %1413 = vmatpush1.bf16.msra.mxu0 %v1256
        %1414 = vmatprep.subr.bf16.mxu0 0
        %1415 = vmatpush1.bf16.msra.mxu0 %v1253
        %1416 = vmatprep.subr.bf16.mxu0 0
        %1417 = vmatpush2.bf16.msra.mxu0 0
        %1418 = vmatprep.subr.bf16.mxu0 0
        %1419 = vmatpush2.bf16.msra.mxu0 0
        %1420 = vmatprep.subr.bf16.mxu0 0
        %1421 = vmatpush2.bf16.msra.mxu0 0
        %1422 = vmatprep.subr.bf16.mxu0 0
        %1423 = vmatpush2.bf16.msra.mxu0 0
        %1424 = vmatprep.subr.bf16.mxu0 0
        %1425 = vmatpush2.bf16.msra.mxu0 0
        %1426 = vmatprep.subr.bf16.mxu0 0
        %1427 = vmatpush2.bf16.msra.mxu0 0
        %1428 = vmatprep.subr.bf16.mxu0 0
        %1429 = vmatpush2.bf16.msra.mxu0 0
        %1430 = vmatprep.subr.bf16.mxu0 0
        %1431 = vmatpush2.bf16.msra.mxu0 0
        %1432 = vmatprep.mubr.bf16.mxu0 0
        %1433 = vmatmul.mubr.bf16.gmra.mxu0 %v1264
        %v1434 = vpop.f32.mrf.mxu0
        %v1435 = vadd.f32 0.0, %v1434
        %v1436 = vpop.f32.mrf.mxu0
        %v1437 = vpop.f32.mrf.mxu0
        %v1438 = vadd.f32 0.0, %v1437
        %v1439 = vpop.f32.mrf.mxu0
        %1440 = vmatprep.mubr.bf16.mxu0 0
        %1441 = vmatmul.mubr.bf16.gmra.mxu0 %v1267
        %v1442 = vpop.f32.mrf.mxu0
        %v1443 = vadd.f32 0.0, %v1442
        %v1444 = vpop.f32.mrf.mxu0
        %v1445 = vpop.f32.mrf.mxu0
        %v1446 = vadd.f32 0.0, %v1445
        %v1447 = vpop.f32.mrf.mxu0
        %1448 = vmatprep.mubr.bf16.mxu0 0
        %1449 = vmatmul.mubr.bf16.gmra.mxu0 %v1270
        %v1450 = vpop.f32.mrf.mxu0
        %v1451 = vadd.f32 0.0, %v1450
        %v1452 = vpop.f32.mrf.mxu0
        %v1453 = vpop.f32.mrf.mxu0
        %v1454 = vadd.f32 0.0, %v1453
        %v1455 = vpop.f32.mrf.mxu0
        %1456 = vmatprep.mubr.bf16.mxu0 0
        %1457 = vmatmul.mubr.bf16.gmra.mxu0 %v1273
        %v1458 = vpop.f32.mrf.mxu0
        %v1459 = vadd.f32 0.0, %v1458
        %v1460 = vpop.f32.mrf.mxu0
        %v1461 = vpop.f32.mrf.mxu0
        %v1462 = vadd.f32 0.0, %v1461
        %v1463 = vpop.f32.mrf.mxu0
        %1464 = vmatprep.mubr.bf16.mxu0 0
        %1465 = vmatmul.mubr.bf16.gmra.mxu0 %v1276
        %v1466 = vpop.f32.mrf.mxu0
        %v1467 = vadd.f32 0.0, %v1466
        %v1468 = vpop.f32.mrf.mxu0
        %v1469 = vpop.f32.mrf.mxu0
        %v1470 = vadd.f32 0.0, %v1469
        %v1471 = vpop.f32.mrf.mxu0
        %1472 = vmatprep.mubr.bf16.mxu0 0
        %1473 = vmatmul.mubr.bf16.gmra.mxu0 %v1279
        %v1474 = vpop.f32.mrf.mxu0
        %v1475 = vadd.f32 0.0, %v1474
        %v1476 = vpop.f32.mrf.mxu0
        %v1477 = vpop.f32.mrf.mxu0
        %v1478 = vadd.f32 0.0, %v1477
        %v1479 = vpop.f32.mrf.mxu0
        %1480 = vmatprep.mubr.bf16.mxu0 0
        %1481 = vmatmul.mubr.bf16.gmra.mxu0 %v1282
        %v1482 = vpop.f32.mrf.mxu0
        %v1483 = vadd.f32 0.0, %v1482
        %v1484 = vpop.f32.mrf.mxu0
        %v1485 = vpop.f32.mrf.mxu0
        %v1486 = vadd.f32 0.0, %v1485
        %v1487 = vpop.f32.mrf.mxu0
        %1488 = vmatprep.mubr.bf16.mxu0 0
        %1489 = vmatmul.mubr.bf16.gmra.mxu0 %v1285
        %v1490 = vpop.f32.mrf.mxu0
        %v1491 = vadd.f32 0.0, %v1490
        %v1492 = vpop.f32.mrf.mxu0
        %v1493 = vpop.f32.mrf.mxu0
        %v1494 = vadd.f32 0.0, %v1493
        %v1495 = vpop.f32.mrf.mxu0
        %1496 = vdwg.mxu0
        %v1497 = vadd.f32 %v956, %v1322
        %v1498 = vadd.f32 %v958, %v1324
        %v1499 = vadd.f32 %v1069, %v1435
        %v1500 = vadd.f32 %v960, %v1326
        %v1501 = vadd.f32 %v962, %v1328
        %v1502 = vadd.f32 %v1072, %v1438
        %v1503 = vadd.f32 %v966, %v1332
        %v1504 = vadd.f32 %v968, %v1334
        %v1505 = vadd.f32 %v1077, %v1443
        %v1506 = vadd.f32 %v970, %v1336
        %v1507 = vadd.f32 %v972, %v1338
        %v1508 = vadd.f32 %v1080, %v1446
        %v1509 = vadd.f32 %v976, %v1342
        %v1510 = vadd.f32 %v978, %v1344
        %v1511 = vadd.f32 %v1085, %v1451
        %v1512 = vadd.f32 %v980, %v1346
        %v1513 = vadd.f32 %v982, %v1348
        %v1514 = vadd.f32 %v1088, %v1454
        %v1515 = vadd.f32 %v986, %v1352
        %v1516 = vadd.f32 %v988, %v1354
        %v1517 = vadd.f32 %v1093, %v1459
        %v1518 = vadd.f32 %v990, %v1356
        %v1519 = vadd.f32 %v992, %v1358
        %v1520 = vadd.f32 %v1096, %v1462
        %v1521 = vadd.f32 %v996, %v1362
        %v1522 = vadd.f32 %v998, %v1364
        %v1523 = vadd.f32 %v1101, %v1467
        %v1524 = vadd.f32 %v1000, %v1366
        %v1525 = vadd.f32 %v1002, %v1368
        %v1526 = vadd.f32 %v1104, %v1470
        %v1527 = vadd.f32 %v1006, %v1372
        %v1528 = vadd.f32 %v1008, %v1374
        %v1529 = vadd.f32 %v1109, %v1475
        %v1530 = vadd.f32 %v1010, %v1376
        %v1531 = vadd.f32 %v1012, %v1378
        %v1532 = vadd.f32 %v1112, %v1478
        %v1533 = vadd.f32 %v1016, %v1382
        %v1534 = vadd.f32 %v1018, %v1384
        %v1535 = vadd.f32 %v1117, %v1483
        %v1536 = vadd.f32 %v1020, %v1386
        %v1537 = vadd.f32 %v1022, %v1388
        %v1538 = vadd.f32 %v1120, %v1486
        %v1539 = vadd.f32 %v1026, %v1392
        %v1540 = vadd.f32 %v1028, %v1394
        %v1541 = vadd.f32 %v1125, %v1491
        %v1542 = vadd.f32 %v1030, %v1396
        %v1543 = vadd.f32 %v1032, %v1398
        %v1544 = vadd.f32 %v1128, %v1494
        %vm1545 = vsmask.f32 2304
        %vm1546 = vsmask.f32 6416
        %vm1547 = vmor %vm1545, %vm1546
        %v1548 = vrot.slane %v334, 5
        %v1549 = vrot.slane %v337, 6
        %v1550 = vor.u32 %v1548, %v1549
        %v1551 = vrot.slane %v1550, 4
        %v1552 = vrot.slane %v347, 5
        %v1553 = vrot.slane %v343, 6
        %v1554 = vor.u32 %v1552, %v1553
        %v1555 = vsel %vm1547, %v1551, %v1554
        %v1556 = vrot.slane %v1554, 4
        %v1557 = vshrl.u32 %v300, 16
        %v1559 = vrot.slane %v1557, 5
        %v1560 = vrot.slane %v353, 6
        %v1561 = vor.u32 %v1559, %v1560
        %v1562 = vsel %vm1547, %v1556, %v1561
        %v1563 = vrot.slane %v358, 5
        %v1564 = vrot.slane %v361, 6
        %v1565 = vor.u32 %v1563, %v1564
        %v1566 = vrot.slane %v1565, 4
        %v1567 = vrot.slane %v371, 5
        %v1568 = vrot.slane %v367, 6
        %v1569 = vor.u32 %v1567, %v1568
        %v1570 = vsel %vm1547, %v1566, %v1569
        %v1571 = vrot.slane %v1569, 4
        %v1572 = vshrl.u32 %v303, 16
        %v1574 = vrot.slane %v1572, 5
        %v1575 = vrot.slane %v377, 6
        %v1576 = vor.u32 %v1574, %v1575
        %v1577 = vsel %vm1547, %v1571, %v1576
        %v1578 = vrot.slane %v382, 5
        %v1579 = vrot.slane %v385, 6
        %v1580 = vor.u32 %v1578, %v1579
        %v1581 = vrot.slane %v1580, 4
        %v1582 = vrot.slane %v395, 5
        %v1583 = vrot.slane %v391, 6
        %v1584 = vor.u32 %v1582, %v1583
        %v1585 = vsel %vm1547, %v1581, %v1584
        %v1586 = vrot.slane %v1584, 4
        %v1587 = vshrl.u32 %v306, 16
        %v1589 = vrot.slane %v1587, 5
        %v1590 = vrot.slane %v401, 6
        %v1591 = vor.u32 %v1589, %v1590
        %v1592 = vsel %vm1547, %v1586, %v1591
        %v1593 = vrot.slane %v406, 5
        %v1594 = vrot.slane %v409, 6
        %v1595 = vor.u32 %v1593, %v1594
        %v1596 = vrot.slane %v1595, 4
        %v1597 = vrot.slane %v419, 5
        %v1598 = vrot.slane %v415, 6
        %v1599 = vor.u32 %v1597, %v1598
        %v1600 = vsel %vm1547, %v1596, %v1599
        %v1601 = vrot.slane %v1599, 4
        %v1602 = vshrl.u32 %v309, 16
        %v1604 = vrot.slane %v1602, 5
        %v1605 = vrot.slane %v425, 6
        %v1606 = vor.u32 %v1604, %v1605
        %v1607 = vsel %vm1547, %v1601, %v1606
        %v1608 = vrot.slane %v430, 5
        %v1609 = vrot.slane %v433, 6
        %v1610 = vor.u32 %v1608, %v1609
        %v1611 = vrot.slane %v1610, 4
        %v1612 = vrot.slane %v443, 5
        %v1613 = vrot.slane %v439, 6
        %v1614 = vor.u32 %v1612, %v1613
        %v1615 = vsel %vm1547, %v1611, %v1614
        %v1616 = vrot.slane %v1614, 4
        %v1617 = vshrl.u32 %v312, 16
        %v1619 = vrot.slane %v1617, 5
        %v1620 = vrot.slane %v449, 6
        %v1621 = vor.u32 %v1619, %v1620
        %v1622 = vsel %vm1547, %v1616, %v1621
        %v1623 = vrot.slane %v454, 5
        %v1624 = vrot.slane %v457, 6
        %v1625 = vor.u32 %v1623, %v1624
        %v1626 = vrot.slane %v1625, 4
        %v1627 = vrot.slane %v467, 5
        %v1628 = vrot.slane %v463, 6
        %v1629 = vor.u32 %v1627, %v1628
        %v1630 = vsel %vm1547, %v1626, %v1629
        %v1631 = vrot.slane %v1629, 4
        %v1632 = vshrl.u32 %v315, 16
        %v1634 = vrot.slane %v1632, 5
        %v1635 = vrot.slane %v473, 6
        %v1636 = vor.u32 %v1634, %v1635
        %v1637 = vsel %vm1547, %v1631, %v1636
        %v1638 = vrot.slane %v478, 5
        %v1639 = vrot.slane %v481, 6
        %v1640 = vor.u32 %v1638, %v1639
        %v1641 = vrot.slane %v1640, 4
        %v1642 = vrot.slane %v491, 5
        %v1643 = vrot.slane %v487, 6
        %v1644 = vor.u32 %v1642, %v1643
        %v1645 = vsel %vm1547, %v1641, %v1644
        %v1646 = vrot.slane %v1644, 4
        %v1647 = vshrl.u32 %v318, 16
        %v1649 = vrot.slane %v1647, 5
        %v1650 = vrot.slane %v497, 6
        %v1651 = vor.u32 %v1649, %v1650
        %v1652 = vsel %vm1547, %v1646, %v1651
        %v1653 = vrot.slane %v502, 5
        %v1654 = vrot.slane %v505, 6
        %v1655 = vor.u32 %v1653, %v1654
        %v1656 = vrot.slane %v1655, 4
        %v1657 = vrot.slane %v515, 5
        %v1658 = vrot.slane %v511, 6
        %v1659 = vor.u32 %v1657, %v1658
        %v1660 = vsel %vm1547, %v1656, %v1659
        %v1661 = vrot.slane %v1659, 4
        %v1662 = vshrl.u32 %v321, 16
        %v1664 = vrot.slane %v1662, 5
        %v1665 = vrot.slane %v521, 6
        %v1666 = vor.u32 %v1664, %v1665
        %v1667 = vsel %vm1547, %v1661, %v1666
        %s1668 = scalar_lea.vmem %s1, 144
        %v1669 = vld [vmem:[%s1668] sm:$0xff]
        %v1670 = vld [vmem:[%s1668 + $0x8] sm:$0xf]
        %v1671 = vld [vmem:[%s1668 + $0xc] sm:$0xff]
        %v1672 = vld [vmem:[%s1668 + $0x14] sm:$0xf]
        %v1673 = vld [vmem:[%s1668 + $0x18] sm:$0xff]
        %v1674 = vld [vmem:[%s1668 + $0x20] sm:$0xf]
        %v1675 = vld [vmem:[%s1668 + $0x24] sm:$0xff]
        %v1676 = vld [vmem:[%s1668 + $0x2c] sm:$0xf]
        %v1677 = vunpack.c.l.b16 %v1555
        %v1678 = vunpack.c.l.b16 %v1562
        %v1679 = vunpack.c.l.b16 %v1570
        %v1680 = vunpack.c.l.b16 %v1577
        %v1681 = vunpack.c.l.b16 %v1585
        %v1682 = vunpack.c.l.b16 %v1592
        %v1683 = vunpack.c.l.b16 %v1600
        %v1684 = vunpack.c.l.b16 %v1607
        %v1685 = vunpack.c.l.b16 %v1615
        %v1686 = vunpack.c.l.b16 %v1622
        %v1687 = vunpack.c.l.b16 %v1630
        %v1688 = vunpack.c.l.b16 %v1637
        %v1689 = vunpack.c.l.b16 %v1645
        %v1690 = vunpack.c.l.b16 %v1652
        %v1691 = vunpack.c.l.b16 %v1660
        %v1692 = vunpack.c.l.b16 %v1667
        %v1693 = vpack.c.b16 %v1678, %v1677
        %v1694 = vpack.c.b16 %v1680, %v1679
        %v1695 = vpack.c.b16 %v1682, %v1681
        %v1696 = vpack.c.b16 %v1684, %v1683
        %v1697 = vpack.c.b16 %v1686, %v1685
        %v1698 = vpack.c.b16 %v1688, %v1687
        %v1699 = vpack.c.b16 %v1690, %v1689
        %v1700 = vpack.c.b16 %v1692, %v1691
        %v1709 = vunpack.c.l.b16 %v1669
        %v1710 = vunpack.c.h.b16 %v1669
        %v1711 = vunpack.c.l.b16 %v1670
        %v1712 = vunpack.c.l.b16 %v1671
        %v1713 = vunpack.c.h.b16 %v1671
        %v1714 = vunpack.c.l.b16 %v1672
        %v1715 = vunpack.c.l.b16 %v1673
        %v1716 = vunpack.c.h.b16 %v1673
        %v1717 = vunpack.c.l.b16 %v1674
        %v1718 = vunpack.c.l.b16 %v1675
        %v1719 = vunpack.c.h.b16 %v1675
        %v1720 = vunpack.c.l.b16 %v1676
        %v1721 = vpack.c.b16 %v1712, %v1709
        %v1722 = vpack.c.b16 %v1713, %v1710
        %v1723 = vpack.c.b16 %v1714, %v1711
        %v1724 = vpack.c.b16 %v1718, %v1715
        %v1725 = vpack.c.b16 %v1719, %v1716
        %v1726 = vpack.c.b16 %v1720, %v1717
        %v1734 = vsel %vm590, %v1693, 0
        %v1737 = vsel %vm590, %v1694, 0
        %v1740 = vsel %vm590, %v1695, 0
        %v1743 = vsel %vm590, %v1696, 0
        %v1746 = vsel %vm590, %v1697, 0
        %v1749 = vsel %vm590, %v1698, 0
        %v1752 = vsel %vm590, %v1699, 0
        %v1755 = vsel %vm590, %v1700, 0
        %1757 = vmatprep.subr.bf16.mxu0 0
        %1758 = vmatpush1.bf16.msra.mxu0 0
        %1759 = vmatprep.subr.bf16.mxu0 0
        %1760 = vmatpush1.bf16.msra.mxu0 0
        %1761 = vmatprep.subr.bf16.mxu0 0
        %1762 = vmatpush1.bf16.msra.mxu0 0
        %1763 = vmatprep.subr.bf16.mxu0 0
        %1764 = vmatpush1.bf16.msra.mxu0 0
        %1765 = vmatprep.subr.bf16.mxu0 0
        %1766 = vmatpush1.bf16.msra.mxu0 0
        %1767 = vmatprep.subr.bf16.mxu0 0
        %1768 = vmatpush1.bf16.msra.mxu0 0
        %1769 = vmatprep.subr.bf16.mxu0 %v1725
        %1770 = vmatpush1.bf16.msra.mxu0 %v1724
        %1771 = vmatprep.subr.bf16.mxu0 %v1722
        %1772 = vmatpush1.bf16.msra.mxu0 %v1721
        %1773 = vmatprep.subr.bf16.mxu0 0
        %1774 = vmatpush2.bf16.msra.mxu0 0
        %1775 = vmatprep.subr.bf16.mxu0 0
        %1776 = vmatpush2.bf16.msra.mxu0 0
        %1777 = vmatprep.subr.bf16.mxu0 0
        %1778 = vmatpush2.bf16.msra.mxu0 0
        %1779 = vmatprep.subr.bf16.mxu0 0
        %1780 = vmatpush2.bf16.msra.mxu0 0
        %1781 = vmatprep.subr.bf16.mxu0 0
        %1782 = vmatpush2.bf16.msra.mxu0 0
        %1783 = vmatprep.subr.bf16.mxu0 0
        %1784 = vmatpush2.bf16.msra.mxu0 0
        %1785 = vmatprep.subr.bf16.mxu0 0
        %1786 = vmatpush2.bf16.msra.mxu0 0
        %1787 = vmatprep.subr.bf16.mxu0 0
        %1788 = vmatpush2.bf16.msra.mxu0 0
        %1789 = vmatprep.mubr.bf16.mxu0 0
        %1790 = vmatmul.mubr.bf16.gmra.mxu0 %v1734
        %v1791 = vpop.f32.mrf.mxu0
        %v1792 = vadd.f32 0.0, %v1791
        %v1793 = vpop.f32.mrf.mxu0
        %v1794 = vadd.f32 0.0, %v1793
        %v1795 = vpop.f32.mrf.mxu0
        %v1796 = vadd.f32 0.0, %v1795
        %v1797 = vpop.f32.mrf.mxu0
        %v1798 = vadd.f32 0.0, %v1797
        %1799 = vmatprep.mubr.bf16.mxu0 0
        %1800 = vmatmul.mubr.bf16.gmra.mxu0 %v1737
        %v1801 = vpop.f32.mrf.mxu0
        %v1802 = vadd.f32 0.0, %v1801
        %v1803 = vpop.f32.mrf.mxu0
        %v1804 = vadd.f32 0.0, %v1803
        %v1805 = vpop.f32.mrf.mxu0
        %v1806 = vadd.f32 0.0, %v1805
        %v1807 = vpop.f32.mrf.mxu0
        %v1808 = vadd.f32 0.0, %v1807
        %1809 = vmatprep.mubr.bf16.mxu0 0
        %1810 = vmatmul.mubr.bf16.gmra.mxu0 %v1740
        %v1811 = vpop.f32.mrf.mxu0
        %v1812 = vadd.f32 0.0, %v1811
        %v1813 = vpop.f32.mrf.mxu0
        %v1814 = vadd.f32 0.0, %v1813
        %v1815 = vpop.f32.mrf.mxu0
        %v1816 = vadd.f32 0.0, %v1815
        %v1817 = vpop.f32.mrf.mxu0
        %v1818 = vadd.f32 0.0, %v1817
        %1819 = vmatprep.mubr.bf16.mxu0 0
        %1820 = vmatmul.mubr.bf16.gmra.mxu0 %v1743
        %v1821 = vpop.f32.mrf.mxu0
        %v1822 = vadd.f32 0.0, %v1821
        %v1823 = vpop.f32.mrf.mxu0
        %v1824 = vadd.f32 0.0, %v1823
        %v1825 = vpop.f32.mrf.mxu0
        %v1826 = vadd.f32 0.0, %v1825
        %v1827 = vpop.f32.mrf.mxu0
        %v1828 = vadd.f32 0.0, %v1827
        %1829 = vmatprep.mubr.bf16.mxu0 0
        %1830 = vmatmul.mubr.bf16.gmra.mxu0 %v1746
        %v1831 = vpop.f32.mrf.mxu0
        %v1832 = vadd.f32 0.0, %v1831
        %v1833 = vpop.f32.mrf.mxu0
        %v1834 = vadd.f32 0.0, %v1833
        %v1835 = vpop.f32.mrf.mxu0
        %v1836 = vadd.f32 0.0, %v1835
        %v1837 = vpop.f32.mrf.mxu0
        %v1838 = vadd.f32 0.0, %v1837
        %1839 = vmatprep.mubr.bf16.mxu0 0
        %1840 = vmatmul.mubr.bf16.gmra.mxu0 %v1749
        %v1841 = vpop.f32.mrf.mxu0
        %v1842 = vadd.f32 0.0, %v1841
        %v1843 = vpop.f32.mrf.mxu0
        %v1844 = vadd.f32 0.0, %v1843
        %v1845 = vpop.f32.mrf.mxu0
        %v1846 = vadd.f32 0.0, %v1845
        %v1847 = vpop.f32.mrf.mxu0
        %v1848 = vadd.f32 0.0, %v1847
        %1849 = vmatprep.mubr.bf16.mxu0 0
        %1850 = vmatmul.mubr.bf16.gmra.mxu0 %v1752
        %v1851 = vpop.f32.mrf.mxu0
        %v1852 = vadd.f32 0.0, %v1851
        %v1853 = vpop.f32.mrf.mxu0
        %v1854 = vadd.f32 0.0, %v1853
        %v1855 = vpop.f32.mrf.mxu0
        %v1856 = vadd.f32 0.0, %v1855
        %v1857 = vpop.f32.mrf.mxu0
        %v1858 = vadd.f32 0.0, %v1857
        %1859 = vmatprep.mubr.bf16.mxu0 0
        %1860 = vmatmul.mubr.bf16.gmra.mxu0 %v1755
        %v1861 = vpop.f32.mrf.mxu0
        %v1862 = vadd.f32 0.0, %v1861
        %v1863 = vpop.f32.mrf.mxu0
        %v1864 = vadd.f32 0.0, %v1863
        %v1865 = vpop.f32.mrf.mxu0
        %v1866 = vadd.f32 0.0, %v1865
        %v1867 = vpop.f32.mrf.mxu0
        %v1868 = vadd.f32 0.0, %v1867
        %1869 = vdwg.mxu0
        %1870 = vmatprep.subr.bf16.mxu0 0
        %1871 = vmatpush1.bf16.msra.mxu0 0
        %1872 = vmatprep.subr.bf16.mxu0 0
        %1873 = vmatpush1.bf16.msra.mxu0 0
        %1874 = vmatprep.subr.bf16.mxu0 0
        %1875 = vmatpush1.bf16.msra.mxu0 0
        %1876 = vmatprep.subr.bf16.mxu0 0
        %1877 = vmatpush1.bf16.msra.mxu0 0
        %1878 = vmatprep.subr.bf16.mxu0 0
        %1879 = vmatpush1.bf16.msra.mxu0 0
        %1880 = vmatprep.subr.bf16.mxu0 0
        %1881 = vmatpush1.bf16.msra.mxu0 0
        %1882 = vmatprep.subr.bf16.mxu0 0
        %1883 = vmatpush1.bf16.msra.mxu0 %v1726
        %1884 = vmatprep.subr.bf16.mxu0 0
        %1885 = vmatpush1.bf16.msra.mxu0 %v1723
        %1886 = vmatprep.subr.bf16.mxu0 0
        %1887 = vmatpush2.bf16.msra.mxu0 0
        %1888 = vmatprep.subr.bf16.mxu0 0
        %1889 = vmatpush2.bf16.msra.mxu0 0
        %1890 = vmatprep.subr.bf16.mxu0 0
        %1891 = vmatpush2.bf16.msra.mxu0 0
        %1892 = vmatprep.subr.bf16.mxu0 0
        %1893 = vmatpush2.bf16.msra.mxu0 0
        %1894 = vmatprep.subr.bf16.mxu0 0
        %1895 = vmatpush2.bf16.msra.mxu0 0
        %1896 = vmatprep.subr.bf16.mxu0 0
        %1897 = vmatpush2.bf16.msra.mxu0 0
        %1898 = vmatprep.subr.bf16.mxu0 0
        %1899 = vmatpush2.bf16.msra.mxu0 0
        %1900 = vmatprep.subr.bf16.mxu0 0
        %1901 = vmatpush2.bf16.msra.mxu0 0
        %1902 = vmatprep.mubr.bf16.mxu0 0
        %1903 = vmatmul.mubr.bf16.gmra.mxu0 %v1734
        %v1904 = vpop.f32.mrf.mxu0
        %v1905 = vadd.f32 0.0, %v1904
        %v1906 = vpop.f32.mrf.mxu0
        %v1907 = vpop.f32.mrf.mxu0
        %v1908 = vadd.f32 0.0, %v1907
        %v1909 = vpop.f32.mrf.mxu0
        %1910 = vmatprep.mubr.bf16.mxu0 0
        %1911 = vmatmul.mubr.bf16.gmra.mxu0 %v1737
        %v1912 = vpop.f32.mrf.mxu0
        %v1913 = vadd.f32 0.0, %v1912
        %v1914 = vpop.f32.mrf.mxu0
        %v1915 = vpop.f32.mrf.mxu0
        %v1916 = vadd.f32 0.0, %v1915
        %v1917 = vpop.f32.mrf.mxu0
        %1918 = vmatprep.mubr.bf16.mxu0 0
        %1919 = vmatmul.mubr.bf16.gmra.mxu0 %v1740
        %v1920 = vpop.f32.mrf.mxu0
        %v1921 = vadd.f32 0.0, %v1920
        %v1922 = vpop.f32.mrf.mxu0
        %v1923 = vpop.f32.mrf.mxu0
        %v1924 = vadd.f32 0.0, %v1923
        %v1925 = vpop.f32.mrf.mxu0
        %1926 = vmatprep.mubr.bf16.mxu0 0
        %1927 = vmatmul.mubr.bf16.gmra.mxu0 %v1743
        %v1928 = vpop.f32.mrf.mxu0
        %v1929 = vadd.f32 0.0, %v1928
        %v1930 = vpop.f32.mrf.mxu0
        %v1931 = vpop.f32.mrf.mxu0
        %v1932 = vadd.f32 0.0, %v1931
        %v1933 = vpop.f32.mrf.mxu0
        %1934 = vmatprep.mubr.bf16.mxu0 0
        %1935 = vmatmul.mubr.bf16.gmra.mxu0 %v1746
        %v1936 = vpop.f32.mrf.mxu0
        %v1937 = vadd.f32 0.0, %v1936
        %v1938 = vpop.f32.mrf.mxu0
        %v1939 = vpop.f32.mrf.mxu0
        %v1940 = vadd.f32 0.0, %v1939
        %v1941 = vpop.f32.mrf.mxu0
        %1942 = vmatprep.mubr.bf16.mxu0 0
        %1943 = vmatmul.mubr.bf16.gmra.mxu0 %v1749
        %v1944 = vpop.f32.mrf.mxu0
        %v1945 = vadd.f32 0.0, %v1944
        %v1946 = vpop.f32.mrf.mxu0
        %v1947 = vpop.f32.mrf.mxu0
        %v1948 = vadd.f32 0.0, %v1947
        %v1949 = vpop.f32.mrf.mxu0
        %1950 = vmatprep.mubr.bf16.mxu0 0
        %1951 = vmatmul.mubr.bf16.gmra.mxu0 %v1752
        %v1952 = vpop.f32.mrf.mxu0
        %v1953 = vadd.f32 0.0, %v1952
        %v1954 = vpop.f32.mrf.mxu0
        %v1955 = vpop.f32.mrf.mxu0
        %v1956 = vadd.f32 0.0, %v1955
        %v1957 = vpop.f32.mrf.mxu0
        %1958 = vmatprep.mubr.bf16.mxu0 0
        %1959 = vmatmul.mubr.bf16.gmra.mxu0 %v1755
        %v1960 = vpop.f32.mrf.mxu0
        %v1961 = vadd.f32 0.0, %v1960
        %v1962 = vpop.f32.mrf.mxu0
        %v1963 = vpop.f32.mrf.mxu0
        %v1964 = vadd.f32 0.0, %v1963
        %v1965 = vpop.f32.mrf.mxu0
        %1966 = vdwg.mxu0
        %v1967 = vadd.f32 %v1497, %v1792
        %v1968 = vadd.f32 %v1498, %v1794
        %v1969 = vadd.f32 %v1499, %v1905
        %v1970 = vadd.f32 %v1500, %v1796
        %v1971 = vadd.f32 %v1501, %v1798
        %v1972 = vadd.f32 %v1502, %v1908
        %v1973 = vadd.f32 %v1503, %v1802
        %v1974 = vadd.f32 %v1504, %v1804
        %v1975 = vadd.f32 %v1505, %v1913
        %v1976 = vadd.f32 %v1506, %v1806
        %v1977 = vadd.f32 %v1507, %v1808
        %v1978 = vadd.f32 %v1508, %v1916
        %v1979 = vadd.f32 %v1509, %v1812
        %v1980 = vadd.f32 %v1510, %v1814
        %v1981 = vadd.f32 %v1511, %v1921
        %v1982 = vadd.f32 %v1512, %v1816
        %v1983 = vadd.f32 %v1513, %v1818
        %v1984 = vadd.f32 %v1514, %v1924
        %v1985 = vadd.f32 %v1515, %v1822
        %v1986 = vadd.f32 %v1516, %v1824
        %v1987 = vadd.f32 %v1517, %v1929
        %v1988 = vadd.f32 %v1518, %v1826
        %v1989 = vadd.f32 %v1519, %v1828
        %v1990 = vadd.f32 %v1520, %v1932
        %v1991 = vadd.f32 %v1521, %v1832
        %v1992 = vadd.f32 %v1522, %v1834
        %v1993 = vadd.f32 %v1523, %v1937
        %v1994 = vadd.f32 %v1524, %v1836
        %v1995 = vadd.f32 %v1525, %v1838
        %v1996 = vadd.f32 %v1526, %v1940
        %v1997 = vadd.f32 %v1527, %v1842
        %v1998 = vadd.f32 %v1528, %v1844
        %v1999 = vadd.f32 %v1529, %v1945
        %v2000 = vadd.f32 %v1530, %v1846
        %v2001 = vadd.f32 %v1531, %v1848
        %v2002 = vadd.f32 %v1532, %v1948
        %v2003 = vadd.f32 %v1533, %v1852
        %v2004 = vadd.f32 %v1534, %v1854
        %v2005 = vadd.f32 %v1535, %v1953
        %v2006 = vadd.f32 %v1536, %v1856
        %v2007 = vadd.f32 %v1537, %v1858
        %v2008 = vadd.f32 %v1538, %v1956
        %v2009 = vadd.f32 %v1539, %v1862
        %v2010 = vadd.f32 %v1540, %v1864
        %v2011 = vadd.f32 %v1541, %v1961
        %v2012 = vadd.f32 %v1542, %v1866
        %v2013 = vadd.f32 %v1543, %v1868
        %v2014 = vadd.f32 %v1544, %v1964
        %vm2015 = vcmask 1041408
        %vm2016 = vcmask 1045508
        %vm2017 = vmor %vm2015, %vm2016
        %v2018 = vrot.slane %v298, 6
        %v2019 = vrot.slane %v2018, 4
        %v2020 = vrot.slane %v299, 6
        %v2021 = vsel %vm2017, %v2019, %v2020
        %v2022 = vrot.slane %v2020, 4
        %v2023 = vrot.slane %v300, 6
        %v2024 = vsel %vm2017, %v2022, %v2023
        %v2025 = vrot.slane %v301, 6
        %v2026 = vrot.slane %v2025, 4
        %v2027 = vrot.slane %v302, 6
        %v2028 = vsel %vm2017, %v2026, %v2027
        %v2029 = vrot.slane %v2027, 4
        %v2030 = vrot.slane %v303, 6
        %v2031 = vsel %vm2017, %v2029, %v2030
        %v2032 = vrot.slane %v304, 6
        %v2033 = vrot.slane %v2032, 4
        %v2034 = vrot.slane %v305, 6
        %v2035 = vsel %vm2017, %v2033, %v2034
        %v2036 = vrot.slane %v2034, 4
        %v2037 = vrot.slane %v306, 6
        %v2038 = vsel %vm2017, %v2036, %v2037
        %v2039 = vrot.slane %v307, 6
        %v2040 = vrot.slane %v2039, 4
        %v2041 = vrot.slane %v308, 6
        %v2042 = vsel %vm2017, %v2040, %v2041
        %v2043 = vrot.slane %v2041, 4
        %v2044 = vrot.slane %v309, 6
        %v2045 = vsel %vm2017, %v2043, %v2044
        %v2046 = vrot.slane %v310, 6
        %v2047 = vrot.slane %v2046, 4
        %v2048 = vrot.slane %v311, 6
        %v2049 = vsel %vm2017, %v2047, %v2048
        %v2050 = vrot.slane %v2048, 4
        %v2051 = vrot.slane %v312, 6
        %v2052 = vsel %vm2017, %v2050, %v2051
        %v2053 = vrot.slane %v313, 6
        %v2054 = vrot.slane %v2053, 4
        %v2055 = vrot.slane %v314, 6
        %v2056 = vsel %vm2017, %v2054, %v2055
        %v2057 = vrot.slane %v2055, 4
        %v2058 = vrot.slane %v315, 6
        %v2059 = vsel %vm2017, %v2057, %v2058
        %v2060 = vrot.slane %v316, 6
        %v2061 = vrot.slane %v2060, 4
        %v2062 = vrot.slane %v317, 6
        %v2063 = vsel %vm2017, %v2061, %v2062
        %v2064 = vrot.slane %v2062, 4
        %v2065 = vrot.slane %v318, 6
        %v2066 = vsel %vm2017, %v2064, %v2065
        %v2067 = vrot.slane %v319, 6
        %v2068 = vrot.slane %v2067, 4
        %v2069 = vrot.slane %v320, 6
        %v2070 = vsel %vm2017, %v2068, %v2069
        %v2071 = vrot.slane %v2069, 4
        %v2072 = vrot.slane %v321, 6
        %v2073 = vsel %vm2017, %v2071, %v2072
        %s2074 = scalar_lea.vmem %s1, 192
        %v2075 = vld [vmem:[%s2074] sm:$0xff]
        %v2076 = vld [vmem:[%s2074 + $0x8] sm:$0xf]
        %v2077 = vld [vmem:[%s2074 + $0xc] sm:$0xff]
        %v2078 = vld [vmem:[%s2074 + $0x14] sm:$0xf]
        %v2079 = vld [vmem:[%s2074 + $0x18] sm:$0xff]
        %v2080 = vld [vmem:[%s2074 + $0x20] sm:$0xf]
        %v2081 = vld [vmem:[%s2074 + $0x24] sm:$0xff]
        %v2082 = vld [vmem:[%s2074 + $0x2c] sm:$0xf]
        %v2083 = vunpack.c.l.b16 %v2021
        %v2084 = vunpack.c.l.b16 %v2024
        %v2085 = vunpack.c.l.b16 %v2028
        %v2086 = vunpack.c.l.b16 %v2031
        %v2087 = vunpack.c.l.b16 %v2035
        %v2088 = vunpack.c.l.b16 %v2038
        %v2089 = vunpack.c.l.b16 %v2042
        %v2090 = vunpack.c.l.b16 %v2045
        %v2091 = vunpack.c.l.b16 %v2049
        %v2092 = vunpack.c.l.b16 %v2052
        %v2093 = vunpack.c.l.b16 %v2056
        %v2094 = vunpack.c.l.b16 %v2059
        %v2095 = vunpack.c.l.b16 %v2063
        %v2096 = vunpack.c.l.b16 %v2066
        %v2097 = vunpack.c.l.b16 %v2070
        %v2098 = vunpack.c.l.b16 %v2073
        %v2099 = vpack.c.b16 %v2084, %v2083
        %v2100 = vpack.c.b16 %v2086, %v2085
        %v2101 = vpack.c.b16 %v2088, %v2087
        %v2102 = vpack.c.b16 %v2090, %v2089
        %v2103 = vpack.c.b16 %v2092, %v2091
        %v2104 = vpack.c.b16 %v2094, %v2093
        %v2105 = vpack.c.b16 %v2096, %v2095
        %v2106 = vpack.c.b16 %v2098, %v2097
        %v2115 = vunpack.c.l.b16 %v2075
        %v2116 = vunpack.c.h.b16 %v2075
        %v2117 = vunpack.c.l.b16 %v2076
        %v2118 = vunpack.c.l.b16 %v2077
        %v2119 = vunpack.c.h.b16 %v2077
        %v2120 = vunpack.c.l.b16 %v2078
        %v2121 = vunpack.c.l.b16 %v2079
        %v2122 = vunpack.c.h.b16 %v2079
        %v2123 = vunpack.c.l.b16 %v2080
        %v2124 = vunpack.c.l.b16 %v2081
        %v2125 = vunpack.c.h.b16 %v2081
        %v2126 = vunpack.c.l.b16 %v2082
        %v2127 = vpack.c.b16 %v2118, %v2115
        %v2128 = vpack.c.b16 %v2119, %v2116
        %v2129 = vpack.c.b16 %v2120, %v2117
        %v2130 = vpack.c.b16 %v2124, %v2121
        %v2131 = vpack.c.b16 %v2125, %v2122
        %v2132 = vpack.c.b16 %v2126, %v2123
        %v2140 = vsel %vm590, %v2099, 0
        %v2143 = vsel %vm590, %v2100, 0
        %v2146 = vsel %vm590, %v2101, 0
        %v2149 = vsel %vm590, %v2102, 0
        %v2152 = vsel %vm590, %v2103, 0
        %v2155 = vsel %vm590, %v2104, 0
        %v2158 = vsel %vm590, %v2105, 0
        %v2161 = vsel %vm590, %v2106, 0
        %2163 = vmatprep.subr.bf16.mxu0 0
        %2164 = vmatpush1.bf16.msra.mxu0 0
        %2165 = vmatprep.subr.bf16.mxu0 0
        %2166 = vmatpush1.bf16.msra.mxu0 0
        %2167 = vmatprep.subr.bf16.mxu0 0
        %2168 = vmatpush1.bf16.msra.mxu0 0
        %2169 = vmatprep.subr.bf16.mxu0 0
        %2170 = vmatpush1.bf16.msra.mxu0 0
        %2171 = vmatprep.subr.bf16.mxu0 0
        %2172 = vmatpush1.bf16.msra.mxu0 0
        %2173 = vmatprep.subr.bf16.mxu0 0
        %2174 = vmatpush1.bf16.msra.mxu0 0
        %2175 = vmatprep.subr.bf16.mxu0 %v2131
        %2176 = vmatpush1.bf16.msra.mxu0 %v2130
        %2177 = vmatprep.subr.bf16.mxu0 %v2128
        %2178 = vmatpush1.bf16.msra.mxu0 %v2127
        %2179 = vmatprep.subr.bf16.mxu0 0
        %2180 = vmatpush2.bf16.msra.mxu0 0
        %2181 = vmatprep.subr.bf16.mxu0 0
        %2182 = vmatpush2.bf16.msra.mxu0 0
        %2183 = vmatprep.subr.bf16.mxu0 0
        %2184 = vmatpush2.bf16.msra.mxu0 0
        %2185 = vmatprep.subr.bf16.mxu0 0
        %2186 = vmatpush2.bf16.msra.mxu0 0
        %2187 = vmatprep.subr.bf16.mxu0 0
        %2188 = vmatpush2.bf16.msra.mxu0 0
        %2189 = vmatprep.subr.bf16.mxu0 0
        %2190 = vmatpush2.bf16.msra.mxu0 0
        %2191 = vmatprep.subr.bf16.mxu0 0
        %2192 = vmatpush2.bf16.msra.mxu0 0
        %2193 = vmatprep.subr.bf16.mxu0 0
        %2194 = vmatpush2.bf16.msra.mxu0 0
        %2195 = vmatprep.mubr.bf16.mxu0 0
        %2196 = vmatmul.mubr.bf16.gmra.mxu0 %v2140
        %v2197 = vpop.f32.mrf.mxu0
        %v2198 = vadd.f32 0.0, %v2197
        %v2199 = vpop.f32.mrf.mxu0
        %v2200 = vadd.f32 0.0, %v2199
        %v2201 = vpop.f32.mrf.mxu0
        %v2202 = vadd.f32 0.0, %v2201
        %v2203 = vpop.f32.mrf.mxu0
        %v2204 = vadd.f32 0.0, %v2203
        %2205 = vmatprep.mubr.bf16.mxu0 0
        %2206 = vmatmul.mubr.bf16.gmra.mxu0 %v2143
        %v2207 = vpop.f32.mrf.mxu0
        %v2208 = vadd.f32 0.0, %v2207
        %v2209 = vpop.f32.mrf.mxu0
        %v2210 = vadd.f32 0.0, %v2209
        %v2211 = vpop.f32.mrf.mxu0
        %v2212 = vadd.f32 0.0, %v2211
        %v2213 = vpop.f32.mrf.mxu0
        %v2214 = vadd.f32 0.0, %v2213
        %2215 = vmatprep.mubr.bf16.mxu0 0
        %2216 = vmatmul.mubr.bf16.gmra.mxu0 %v2146
        %v2217 = vpop.f32.mrf.mxu0
        %v2218 = vadd.f32 0.0, %v2217
        %v2219 = vpop.f32.mrf.mxu0
        %v2220 = vadd.f32 0.0, %v2219
        %v2221 = vpop.f32.mrf.mxu0
        %v2222 = vadd.f32 0.0, %v2221
        %v2223 = vpop.f32.mrf.mxu0
        %v2224 = vadd.f32 0.0, %v2223
        %2225 = vmatprep.mubr.bf16.mxu0 0
        %2226 = vmatmul.mubr.bf16.gmra.mxu0 %v2149
        %v2227 = vpop.f32.mrf.mxu0
        %v2228 = vadd.f32 0.0, %v2227
        %v2229 = vpop.f32.mrf.mxu0
        %v2230 = vadd.f32 0.0, %v2229
        %v2231 = vpop.f32.mrf.mxu0
        %v2232 = vadd.f32 0.0, %v2231
        %v2233 = vpop.f32.mrf.mxu0
        %v2234 = vadd.f32 0.0, %v2233
        %2235 = vmatprep.mubr.bf16.mxu0 0
        %2236 = vmatmul.mubr.bf16.gmra.mxu0 %v2152
        %v2237 = vpop.f32.mrf.mxu0
        %v2238 = vadd.f32 0.0, %v2237
        %v2239 = vpop.f32.mrf.mxu0
        %v2240 = vadd.f32 0.0, %v2239
        %v2241 = vpop.f32.mrf.mxu0
        %v2242 = vadd.f32 0.0, %v2241
        %v2243 = vpop.f32.mrf.mxu0
        %v2244 = vadd.f32 0.0, %v2243
        %2245 = vmatprep.mubr.bf16.mxu0 0
        %2246 = vmatmul.mubr.bf16.gmra.mxu0 %v2155
        %v2247 = vpop.f32.mrf.mxu0
        %v2248 = vadd.f32 0.0, %v2247
        %v2249 = vpop.f32.mrf.mxu0
        %v2250 = vadd.f32 0.0, %v2249
        %v2251 = vpop.f32.mrf.mxu0
        %v2252 = vadd.f32 0.0, %v2251
        %v2253 = vpop.f32.mrf.mxu0
        %v2254 = vadd.f32 0.0, %v2253
        %2255 = vmatprep.mubr.bf16.mxu0 0
        %2256 = vmatmul.mubr.bf16.gmra.mxu0 %v2158
        %v2257 = vpop.f32.mrf.mxu0
        %v2258 = vadd.f32 0.0, %v2257
        %v2259 = vpop.f32.mrf.mxu0
        %v2260 = vadd.f32 0.0, %v2259
        %v2261 = vpop.f32.mrf.mxu0
        %v2262 = vadd.f32 0.0, %v2261
        %v2263 = vpop.f32.mrf.mxu0
        %v2264 = vadd.f32 0.0, %v2263
        %2265 = vmatprep.mubr.bf16.mxu0 0
        %2266 = vmatmul.mubr.bf16.gmra.mxu0 %v2161
        %v2267 = vpop.f32.mrf.mxu0
        %v2268 = vadd.f32 0.0, %v2267
        %v2269 = vpop.f32.mrf.mxu0
        %v2270 = vadd.f32 0.0, %v2269
        %v2271 = vpop.f32.mrf.mxu0
        %v2272 = vadd.f32 0.0, %v2271
        %v2273 = vpop.f32.mrf.mxu0
        %v2274 = vadd.f32 0.0, %v2273
        %2275 = vdwg.mxu0
        %2276 = vmatprep.subr.bf16.mxu0 0
        %2277 = vmatpush1.bf16.msra.mxu0 0
        %2278 = vmatprep.subr.bf16.mxu0 0
        %2279 = vmatpush1.bf16.msra.mxu0 0
        %2280 = vmatprep.subr.bf16.mxu0 0
        %2281 = vmatpush1.bf16.msra.mxu0 0
        %2282 = vmatprep.subr.bf16.mxu0 0
        %2283 = vmatpush1.bf16.msra.mxu0 0
        %2284 = vmatprep.subr.bf16.mxu0 0
        %2285 = vmatpush1.bf16.msra.mxu0 0
        %2286 = vmatprep.subr.bf16.mxu0 0
        %2287 = vmatpush1.bf16.msra.mxu0 0
        %2288 = vmatprep.subr.bf16.mxu0 0
        %2289 = vmatpush1.bf16.msra.mxu0 %v2132
        %2290 = vmatprep.subr.bf16.mxu0 0
        %2291 = vmatpush1.bf16.msra.mxu0 %v2129
        %2292 = vmatprep.subr.bf16.mxu0 0
        %2293 = vmatpush2.bf16.msra.mxu0 0
        %2294 = vmatprep.subr.bf16.mxu0 0
        %2295 = vmatpush2.bf16.msra.mxu0 0
        %2296 = vmatprep.subr.bf16.mxu0 0
        %2297 = vmatpush2.bf16.msra.mxu0 0
        %2298 = vmatprep.subr.bf16.mxu0 0
        %2299 = vmatpush2.bf16.msra.mxu0 0
        %2300 = vmatprep.subr.bf16.mxu0 0
        %2301 = vmatpush2.bf16.msra.mxu0 0
        %2302 = vmatprep.subr.bf16.mxu0 0
        %2303 = vmatpush2.bf16.msra.mxu0 0
        %2304 = vmatprep.subr.bf16.mxu0 0
        %2305 = vmatpush2.bf16.msra.mxu0 0
        %2306 = vmatprep.subr.bf16.mxu0 0
        %2307 = vmatpush2.bf16.msra.mxu0 0
        %2308 = vmatprep.mubr.bf16.mxu0 0
        %2309 = vmatmul.mubr.bf16.gmra.mxu0 %v2140
        %v2310 = vpop.f32.mrf.mxu0
        %v2311 = vadd.f32 0.0, %v2310
        %v2312 = vpop.f32.mrf.mxu0
        %v2313 = vpop.f32.mrf.mxu0
        %v2314 = vadd.f32 0.0, %v2313
        %v2315 = vpop.f32.mrf.mxu0
        %2316 = vmatprep.mubr.bf16.mxu0 0
        %2317 = vmatmul.mubr.bf16.gmra.mxu0 %v2143
        %v2318 = vpop.f32.mrf.mxu0
        %v2319 = vadd.f32 0.0, %v2318
        %v2320 = vpop.f32.mrf.mxu0
        %v2321 = vpop.f32.mrf.mxu0
        %v2322 = vadd.f32 0.0, %v2321
        %v2323 = vpop.f32.mrf.mxu0
        %2324 = vmatprep.mubr.bf16.mxu0 0
        %2325 = vmatmul.mubr.bf16.gmra.mxu0 %v2146
        %v2326 = vpop.f32.mrf.mxu0
        %v2327 = vadd.f32 0.0, %v2326
        %v2328 = vpop.f32.mrf.mxu0
        %v2329 = vpop.f32.mrf.mxu0
        %v2330 = vadd.f32 0.0, %v2329
        %v2331 = vpop.f32.mrf.mxu0
        %2332 = vmatprep.mubr.bf16.mxu0 0
        %2333 = vmatmul.mubr.bf16.gmra.mxu0 %v2149
        %v2334 = vpop.f32.mrf.mxu0
        %v2335 = vadd.f32 0.0, %v2334
        %v2336 = vpop.f32.mrf.mxu0
        %v2337 = vpop.f32.mrf.mxu0
        %v2338 = vadd.f32 0.0, %v2337
        %v2339 = vpop.f32.mrf.mxu0
        %2340 = vmatprep.mubr.bf16.mxu0 0
        %2341 = vmatmul.mubr.bf16.gmra.mxu0 %v2152
        %v2342 = vpop.f32.mrf.mxu0
        %v2343 = vadd.f32 0.0, %v2342
        %v2344 = vpop.f32.mrf.mxu0
        %v2345 = vpop.f32.mrf.mxu0
        %v2346 = vadd.f32 0.0, %v2345
        %v2347 = vpop.f32.mrf.mxu0
        %2348 = vmatprep.mubr.bf16.mxu0 0
        %2349 = vmatmul.mubr.bf16.gmra.mxu0 %v2155
        %v2350 = vpop.f32.mrf.mxu0
        %v2351 = vadd.f32 0.0, %v2350
        %v2352 = vpop.f32.mrf.mxu0
        %v2353 = vpop.f32.mrf.mxu0
        %v2354 = vadd.f32 0.0, %v2353
        %v2355 = vpop.f32.mrf.mxu0
        %2356 = vmatprep.mubr.bf16.mxu0 0
        %2357 = vmatmul.mubr.bf16.gmra.mxu0 %v2158
        %v2358 = vpop.f32.mrf.mxu0
        %v2359 = vadd.f32 0.0, %v2358
        %v2360 = vpop.f32.mrf.mxu0
        %v2361 = vpop.f32.mrf.mxu0
        %v2362 = vadd.f32 0.0, %v2361
        %v2363 = vpop.f32.mrf.mxu0
        %2364 = vmatprep.mubr.bf16.mxu0 0
        %2365 = vmatmul.mubr.bf16.gmra.mxu0 %v2161
        %v2366 = vpop.f32.mrf.mxu0
        %v2367 = vadd.f32 0.0, %v2366
        %v2368 = vpop.f32.mrf.mxu0
        %v2369 = vpop.f32.mrf.mxu0
        %v2370 = vadd.f32 0.0, %v2369
        %v2371 = vpop.f32.mrf.mxu0
        %2372 = vdwg.mxu0
        %v2373 = vadd.f32 %v1967, %v2198
        %v2374 = vadd.f32 %v1968, %v2200
        %v2375 = vadd.f32 %v1969, %v2311
        %v2376 = vadd.f32 %v1970, %v2202
        %v2377 = vadd.f32 %v1971, %v2204
        %v2378 = vadd.f32 %v1972, %v2314
        %v2379 = vadd.f32 %v1973, %v2208
        %v2380 = vadd.f32 %v1974, %v2210
        %v2381 = vadd.f32 %v1975, %v2319
        %v2382 = vadd.f32 %v1976, %v2212
        %v2383 = vadd.f32 %v1977, %v2214
        %v2384 = vadd.f32 %v1978, %v2322
        %v2385 = vadd.f32 %v1979, %v2218
        %v2386 = vadd.f32 %v1980, %v2220
        %v2387 = vadd.f32 %v1981, %v2327
        %v2388 = vadd.f32 %v1982, %v2222
        %v2389 = vadd.f32 %v1983, %v2224
        %v2390 = vadd.f32 %v1984, %v2330
        %v2391 = vadd.f32 %v1985, %v2228
        %v2392 = vadd.f32 %v1986, %v2230
        %v2393 = vadd.f32 %v1987, %v2335
        %v2394 = vadd.f32 %v1988, %v2232
        %v2395 = vadd.f32 %v1989, %v2234
        %v2396 = vadd.f32 %v1990, %v2338
        %v2397 = vadd.f32 %v1991, %v2238
        %v2398 = vadd.f32 %v1992, %v2240
        %v2399 = vadd.f32 %v1993, %v2343
        %v2400 = vadd.f32 %v1994, %v2242
        %v2401 = vadd.f32 %v1995, %v2244
        %v2402 = vadd.f32 %v1996, %v2346
        %v2403 = vadd.f32 %v1997, %v2248
        %v2404 = vadd.f32 %v1998, %v2250
        %v2405 = vadd.f32 %v1999, %v2351
        %v2406 = vadd.f32 %v2000, %v2252
        %v2407 = vadd.f32 %v2001, %v2254
        %v2408 = vadd.f32 %v2002, %v2354
        %v2409 = vadd.f32 %v2003, %v2258
        %v2410 = vadd.f32 %v2004, %v2260
        %v2411 = vadd.f32 %v2005, %v2359
        %v2412 = vadd.f32 %v2006, %v2262
        %v2413 = vadd.f32 %v2007, %v2264
        %v2414 = vadd.f32 %v2008, %v2362
        %v2415 = vadd.f32 %v2009, %v2268
        %v2416 = vadd.f32 %v2010, %v2270
        %v2417 = vadd.f32 %v2011, %v2367
        %v2418 = vadd.f32 %v2012, %v2272
        %v2419 = vadd.f32 %v2013, %v2274
        %v2420 = vadd.f32 %v2014, %v2370
        %v2421 = vld [vmem:[%s2] sm:$0xff]
        %v2422 = vld [vmem:[%s2 + $0x8] sm:$0xff]
        %v2423 = vld [vmem:[%s2 + $0x10] sm:$0xff]
        %v2424 = vld [vmem:[%s2 + $0x18] sm:$0xff]
        %v2425 = vld [vmem:[%s2 + $0x20] sm:$0xff]
        %v2426 = vld [vmem:[%s2 + $0x28] sm:$0xff]
        %v2427 = vadd.f32 %v2373, %v2421
        %v2428 = vadd.f32 %v2374, %v2422
        %v2429 = vadd.f32 %v2375, %v2423
        %v2430 = vadd.f32 %v2376, %v2424
        %v2431 = vadd.f32 %v2377, %v2425
        %v2432 = vadd.f32 %v2378, %v2426
        %v2433 = vadd.f32 %v2379, %v2421
        %v2434 = vadd.f32 %v2380, %v2422
        %v2435 = vadd.f32 %v2381, %v2423
        %v2436 = vadd.f32 %v2382, %v2424
        %v2437 = vadd.f32 %v2383, %v2425
        %v2438 = vadd.f32 %v2384, %v2426
        %v2439 = vadd.f32 %v2385, %v2421
        %v2440 = vadd.f32 %v2386, %v2422
        %v2441 = vadd.f32 %v2387, %v2423
        %v2442 = vadd.f32 %v2388, %v2424
        %v2443 = vadd.f32 %v2389, %v2425
        %v2444 = vadd.f32 %v2390, %v2426
        %v2445 = vadd.f32 %v2391, %v2421
        %v2446 = vadd.f32 %v2392, %v2422
        %v2447 = vadd.f32 %v2393, %v2423
        %v2448 = vadd.f32 %v2394, %v2424
        %v2449 = vadd.f32 %v2395, %v2425
        %v2450 = vadd.f32 %v2396, %v2426
        %v2451 = vadd.f32 %v2397, %v2421
        %v2452 = vadd.f32 %v2398, %v2422
        %v2453 = vadd.f32 %v2399, %v2423
        %v2454 = vadd.f32 %v2400, %v2424
        %v2455 = vadd.f32 %v2401, %v2425
        %v2456 = vadd.f32 %v2402, %v2426
        %v2457 = vadd.f32 %v2403, %v2421
        %v2458 = vadd.f32 %v2404, %v2422
        %v2459 = vadd.f32 %v2405, %v2423
        %v2460 = vadd.f32 %v2406, %v2424
        %v2461 = vadd.f32 %v2407, %v2425
        %v2462 = vadd.f32 %v2408, %v2426
        %v2463 = vadd.f32 %v2409, %v2421
        %v2464 = vadd.f32 %v2410, %v2422
        %v2465 = vadd.f32 %v2411, %v2423
        %v2466 = vadd.f32 %v2412, %v2424
        %v2467 = vadd.f32 %v2413, %v2425
        %v2468 = vadd.f32 %v2414, %v2426
        %v2469 = vadd.f32 %v2415, %v2421
        %v2470 = vadd.f32 %v2416, %v2422
        %v2471 = vadd.f32 %v2417, %v2423
        %v2472 = vadd.f32 %v2418, %v2424
        %v2473 = vadd.f32 %v2419, %v2425
        %v2474 = vadd.f32 %v2420, %v2426
        %v2475 = vmax.f32 %v2427, 0.0
        %v2476 = vmax.f32 %v2428, 0.0
        %v2477 = vmax.f32 %v2429, 0.0
        %v2478 = vmax.f32 %v2430, 0.0
        %v2479 = vmax.f32 %v2431, 0.0
        %v2480 = vmax.f32 %v2432, 0.0
        %v2481 = vmax.f32 %v2433, 0.0
        %v2482 = vmax.f32 %v2434, 0.0
        %v2483 = vmax.f32 %v2435, 0.0
        %v2484 = vmax.f32 %v2436, 0.0
        %v2485 = vmax.f32 %v2437, 0.0
        %v2486 = vmax.f32 %v2438, 0.0
        %v2487 = vmax.f32 %v2439, 0.0
        %v2488 = vmax.f32 %v2440, 0.0
        %v2489 = vmax.f32 %v2441, 0.0
        %v2490 = vmax.f32 %v2442, 0.0
        %v2491 = vmax.f32 %v2443, 0.0
        %v2492 = vmax.f32 %v2444, 0.0
        %v2493 = vmax.f32 %v2445, 0.0
        %v2494 = vmax.f32 %v2446, 0.0
        %v2495 = vmax.f32 %v2447, 0.0
        %v2496 = vmax.f32 %v2448, 0.0
        %v2497 = vmax.f32 %v2449, 0.0
        %v2498 = vmax.f32 %v2450, 0.0
        %v2499 = vmax.f32 %v2451, 0.0
        %v2500 = vmax.f32 %v2452, 0.0
        %v2501 = vmax.f32 %v2453, 0.0
        %v2502 = vmax.f32 %v2454, 0.0
        %v2503 = vmax.f32 %v2455, 0.0
        %v2504 = vmax.f32 %v2456, 0.0
        %v2505 = vmax.f32 %v2457, 0.0
        %v2506 = vmax.f32 %v2458, 0.0
        %v2507 = vmax.f32 %v2459, 0.0
        %v2508 = vmax.f32 %v2460, 0.0
        %v2509 = vmax.f32 %v2461, 0.0
        %v2510 = vmax.f32 %v2462, 0.0
        %v2511 = vmax.f32 %v2463, 0.0
        %v2512 = vmax.f32 %v2464, 0.0
        %v2513 = vmax.f32 %v2465, 0.0
        %v2514 = vmax.f32 %v2466, 0.0
        %v2515 = vmax.f32 %v2467, 0.0
        %v2516 = vmax.f32 %v2468, 0.0
        %v2517 = vmax.f32 %v2469, 0.0
        %v2518 = vmax.f32 %v2470, 0.0
        %v2519 = vmax.f32 %v2471, 0.0
        %v2520 = vmax.f32 %v2472, 0.0
        %v2521 = vmax.f32 %v2473, 0.0
        %v2522 = vmax.f32 %v2474, 0.0
        %v2523 = vmax.f32 %v2475, %v2478
        %v2524 = vrot.slane %v2523, 4
        %v2525 = vmax.f32 %v2523, %v2524
        %v2526 = vrot.slane %v2525, 2
        %v2527 = vmax.f32 %v2525, %v2526
        %v2528 = vrot.slane %v2527, 1
        %v2529 = vmax.f32 %v2527, %v2528
        %v2530 = vmax.f32 %v2476, %v2479
        %v2531 = vrot.slane %v2530, 4
        %v2532 = vmax.f32 %v2530, %v2531
        %v2533 = vrot.slane %v2532, 2
        %v2534 = vmax.f32 %v2532, %v2533
        %v2535 = vrot.slane %v2534, 1
        %v2536 = vmax.f32 %v2534, %v2535
        %v2537 = vmax.f32 %v2477, %v2480
        %v2538 = vrot.slane %v2537, 4
        %v2539 = vmax.f32 %v2537, %v2538
        %v2540 = vrot.slane %v2539, 2
        %v2541 = vmax.f32 %v2539, %v2540
        %v2542 = vrot.slane %v2541, 1
        %v2543 = vmax.f32 %v2541, %v2542
        %v2544 = vmax.f32 %v2481, %v2484
        %v2545 = vrot.slane %v2544, 4
        %v2546 = vmax.f32 %v2544, %v2545
        %v2547 = vrot.slane %v2546, 2
        %v2548 = vmax.f32 %v2546, %v2547
        %v2549 = vrot.slane %v2548, 1
        %v2550 = vmax.f32 %v2548, %v2549
        %v2551 = vmax.f32 %v2482, %v2485
        %v2552 = vrot.slane %v2551, 4
        %v2553 = vmax.f32 %v2551, %v2552
        %v2554 = vrot.slane %v2553, 2
        %v2555 = vmax.f32 %v2553, %v2554
        %v2556 = vrot.slane %v2555, 1
        %v2557 = vmax.f32 %v2555, %v2556
        %v2558 = vmax.f32 %v2483, %v2486
        %v2559 = vrot.slane %v2558, 4
        %v2560 = vmax.f32 %v2558, %v2559
        %v2561 = vrot.slane %v2560, 2
        %v2562 = vmax.f32 %v2560, %v2561
        %v2563 = vrot.slane %v2562, 1
        %v2564 = vmax.f32 %v2562, %v2563
        %v2565 = vmax.f32 %v2487, %v2490
        %v2566 = vrot.slane %v2565, 4
        %v2567 = vmax.f32 %v2565, %v2566
        %v2568 = vrot.slane %v2567, 2
        %v2569 = vmax.f32 %v2567, %v2568
        %v2570 = vrot.slane %v2569, 1
        %v2571 = vmax.f32 %v2569, %v2570
        %v2572 = vmax.f32 %v2488, %v2491
        %v2573 = vrot.slane %v2572, 4
        %v2574 = vmax.f32 %v2572, %v2573
        %v2575 = vrot.slane %v2574, 2
        %v2576 = vmax.f32 %v2574, %v2575
        %v2577 = vrot.slane %v2576, 1
        %v2578 = vmax.f32 %v2576, %v2577
        %v2579 = vmax.f32 %v2489, %v2492
        %v2580 = vrot.slane %v2579, 4
        %v2581 = vmax.f32 %v2579, %v2580
        %v2582 = vrot.slane %v2581, 2
        %v2583 = vmax.f32 %v2581, %v2582
        %v2584 = vrot.slane %v2583, 1
        %v2585 = vmax.f32 %v2583, %v2584
        %v2586 = vmax.f32 %v2493, %v2496
        %v2587 = vrot.slane %v2586, 4
        %v2588 = vmax.f32 %v2586, %v2587
        %v2589 = vrot.slane %v2588, 2
        %v2590 = vmax.f32 %v2588, %v2589
        %v2591 = vrot.slane %v2590, 1
        %v2592 = vmax.f32 %v2590, %v2591
        %v2593 = vmax.f32 %v2494, %v2497
        %v2594 = vrot.slane %v2593, 4
        %v2595 = vmax.f32 %v2593, %v2594
        %v2596 = vrot.slane %v2595, 2
        %v2597 = vmax.f32 %v2595, %v2596
        %v2598 = vrot.slane %v2597, 1
        %v2599 = vmax.f32 %v2597, %v2598
        %v2600 = vmax.f32 %v2495, %v2498
        %v2601 = vrot.slane %v2600, 4
        %v2602 = vmax.f32 %v2600, %v2601
        %v2603 = vrot.slane %v2602, 2
        %v2604 = vmax.f32 %v2602, %v2603
        %v2605 = vrot.slane %v2604, 1
        %v2606 = vmax.f32 %v2604, %v2605
        %v2607 = vmax.f32 %v2499, %v2502
        %v2608 = vrot.slane %v2607, 4
        %v2609 = vmax.f32 %v2607, %v2608
        %v2610 = vrot.slane %v2609, 2
        %v2611 = vmax.f32 %v2609, %v2610
        %v2612 = vrot.slane %v2611, 1
        %v2613 = vmax.f32 %v2611, %v2612
        %v2614 = vmax.f32 %v2500, %v2503
        %v2615 = vrot.slane %v2614, 4
        %v2616 = vmax.f32 %v2614, %v2615
        %v2617 = vrot.slane %v2616, 2
        %v2618 = vmax.f32 %v2616, %v2617
        %v2619 = vrot.slane %v2618, 1
        %v2620 = vmax.f32 %v2618, %v2619
        %v2621 = vmax.f32 %v2501, %v2504
        %v2622 = vrot.slane %v2621, 4
        %v2623 = vmax.f32 %v2621, %v2622
        %v2624 = vrot.slane %v2623, 2
        %v2625 = vmax.f32 %v2623, %v2624
        %v2626 = vrot.slane %v2625, 1
        %v2627 = vmax.f32 %v2625, %v2626
        %v2628 = vmax.f32 %v2505, %v2508
        %v2629 = vrot.slane %v2628, 4
        %v2630 = vmax.f32 %v2628, %v2629
        %v2631 = vrot.slane %v2630, 2
        %v2632 = vmax.f32 %v2630, %v2631
        %v2633 = vrot.slane %v2632, 1
        %v2634 = vmax.f32 %v2632, %v2633
        %v2635 = vmax.f32 %v2506, %v2509
        %v2636 = vrot.slane %v2635, 4
        %v2637 = vmax.f32 %v2635, %v2636
        %v2638 = vrot.slane %v2637, 2
        %v2639 = vmax.f32 %v2637, %v2638
        %v2640 = vrot.slane %v2639, 1
        %v2641 = vmax.f32 %v2639, %v2640
        %v2642 = vmax.f32 %v2507, %v2510
        %v2643 = vrot.slane %v2642, 4
        %v2644 = vmax.f32 %v2642, %v2643
        %v2645 = vrot.slane %v2644, 2
        %v2646 = vmax.f32 %v2644, %v2645
        %v2647 = vrot.slane %v2646, 1
        %v2648 = vmax.f32 %v2646, %v2647
        %v2649 = vmax.f32 %v2511, %v2514
        %v2650 = vrot.slane %v2649, 4
        %v2651 = vmax.f32 %v2649, %v2650
        %v2652 = vrot.slane %v2651, 2
        %v2653 = vmax.f32 %v2651, %v2652
        %v2654 = vrot.slane %v2653, 1
        %v2655 = vmax.f32 %v2653, %v2654
        %v2656 = vmax.f32 %v2512, %v2515
        %v2657 = vrot.slane %v2656, 4
        %v2658 = vmax.f32 %v2656, %v2657
        %v2659 = vrot.slane %v2658, 2
        %v2660 = vmax.f32 %v2658, %v2659
        %v2661 = vrot.slane %v2660, 1
        %v2662 = vmax.f32 %v2660, %v2661
        %v2663 = vmax.f32 %v2513, %v2516
        %v2664 = vrot.slane %v2663, 4
        %v2665 = vmax.f32 %v2663, %v2664
        %v2666 = vrot.slane %v2665, 2
        %v2667 = vmax.f32 %v2665, %v2666
        %v2668 = vrot.slane %v2667, 1
        %v2669 = vmax.f32 %v2667, %v2668
        %v2670 = vmax.f32 %v2517, %v2520
        %v2671 = vrot.slane %v2670, 4
        %v2672 = vmax.f32 %v2670, %v2671
        %v2673 = vrot.slane %v2672, 2
        %v2674 = vmax.f32 %v2672, %v2673
        %v2675 = vrot.slane %v2674, 1
        %v2676 = vmax.f32 %v2674, %v2675
        %v2677 = vmax.f32 %v2518, %v2521
        %v2678 = vrot.slane %v2677, 4
        %v2679 = vmax.f32 %v2677, %v2678
        %v2680 = vrot.slane %v2679, 2
        %v2681 = vmax.f32 %v2679, %v2680
        %v2682 = vrot.slane %v2681, 1
        %v2683 = vmax.f32 %v2681, %v2682
        %v2684 = vmax.f32 %v2519, %v2522
        %v2685 = vrot.slane %v2684, 4
        %v2686 = vmax.f32 %v2684, %v2685
        %v2687 = vrot.slane %v2686, 2
        %v2688 = vmax.f32 %v2686, %v2687
        %v2689 = vrot.slane %v2688, 1
        %v2690 = vmax.f32 %v2688, %v2689
        %v2691 = vpack.c.bf16 %v2529, %v2529
        %v2692 = vpack.c.bf16 %v2536, %v2536
        %v2693 = vpack.c.bf16 %v2543, %v2543
        %v2694 = vpack.c.bf16 %v2550, %v2550
        %v2695 = vpack.c.bf16 %v2557, %v2557
        %v2696 = vpack.c.bf16 %v2564, %v2564
        %v2697 = vpack.c.bf16 %v2571, %v2571
        %v2698 = vpack.c.bf16 %v2578, %v2578
        %v2699 = vpack.c.bf16 %v2585, %v2585
        %v2700 = vpack.c.bf16 %v2592, %v2592
        %v2701 = vpack.c.bf16 %v2599, %v2599
        %v2702 = vpack.c.bf16 %v2606, %v2606
        %v2703 = vpack.c.bf16 %v2613, %v2613
        %v2704 = vpack.c.bf16 %v2620, %v2620
        %v2705 = vpack.c.bf16 %v2627, %v2627
        %v2706 = vpack.c.bf16 %v2634, %v2634
        %v2707 = vpack.c.bf16 %v2641, %v2641
        %v2708 = vpack.c.bf16 %v2648, %v2648
        %v2709 = vpack.c.bf16 %v2655, %v2655
        %v2710 = vpack.c.bf16 %v2662, %v2662
        %v2711 = vpack.c.bf16 %v2669, %v2669
        %v2712 = vpack.c.bf16 %v2676, %v2676
        %v2713 = vpack.c.bf16 %v2683, %v2683
        %v2714 = vpack.c.bf16 %v2690, %v2690
        %v2715 = vld [vmem:[#allocation2] sm:$0xf]
        %v2716 = vld [vmem:[#allocation2 + $0x4] sm:$0xf]
        %v2717 = vld [vmem:[#allocation2 + $0x8] sm:$0xf]
        %v2718 = vld [vmem:[#allocation2 + $0xc] sm:$0xf]
        %v2719 = vld [vmem:[#allocation2 + $0x10] sm:$0xf]
        %v2720 = vld [vmem:[#allocation2 + $0x14] sm:$0xf]
        %v2721 = vld [vmem:[#allocation2 + $0x18] sm:$0xf]
        %v2722 = vld [vmem:[#allocation2 + $0x1c] sm:$0xf]
        %v2723 = vld [vmem:[#allocation2 + $0x20] sm:$0xf]
        %v2724 = vld [vmem:[#allocation2 + $0x24] sm:$0xf]
        %v2725 = vld [vmem:[#allocation2 + $0x28] sm:$0xf]
        %v2726 = vld [vmem:[#allocation2 + $0x2c] sm:$0xf]
        %v2727 = vld [vmem:[#allocation2 + $0x30] sm:$0xf]
        %v2728 = vld [vmem:[#allocation2 + $0x34] sm:$0xf]
        %v2729 = vld [vmem:[#allocation2 + $0x38] sm:$0xf]
        %v2730 = vld [vmem:[#allocation2 + $0x3c] sm:$0xf]
        %v2731 = vld [vmem:[#allocation2 + $0x40] sm:$0xf]
        %v2732 = vld [vmem:[#allocation2 + $0x44] sm:$0xf]
        %v2733 = vld [vmem:[#allocation2 + $0x48] sm:$0xf]
        %v2734 = vld [vmem:[#allocation2 + $0x4c] sm:$0xf]
        %v2735 = vld [vmem:[#allocation2 + $0x50] sm:$0xf]
        %v2736 = vld [vmem:[#allocation2 + $0x54] sm:$0xf]
        %v2737 = vld [vmem:[#allocation2 + $0x58] sm:$0xf]
        %v2738 = vld [vmem:[#allocation2 + $0x5c] sm:$0xf]
        %v2739 = vld [vmem:[#allocation2 + $0x60] sm:$0xf]
        %v2740 = vld [vmem:[#allocation2 + $0x64] sm:$0xf]
        %v2741 = vld [vmem:[#allocation2 + $0x68] sm:$0xf]
        %v2742 = vld [vmem:[#allocation2 + $0x6c] sm:$0xf]
        %v2743 = vld [vmem:[#allocation2 + $0x70] sm:$0xf]
        %v2744 = vld [vmem:[#allocation2 + $0x74] sm:$0xf]
        %v2745 = vld [vmem:[#allocation2 + $0x78] sm:$0xf]
        %v2746 = vld [vmem:[#allocation2 + $0x7c] sm:$0xf]
        %v2747 = vld [vmem:[#allocation2 + $0x80] sm:$0xf]
        %v2748 = vld [vmem:[#allocation2 + $0x84] sm:$0xf]
        %v2749 = vld [vmem:[#allocation2 + $0x88] sm:$0xf]
        %v2750 = vld [vmem:[#allocation2 + $0x8c] sm:$0xf]
        %v2751 = vld [vmem:[#allocation2 + $0x90] sm:$0xf]
        %v2752 = vld [vmem:[#allocation2 + $0x94] sm:$0xf]
        %v2753 = vld [vmem:[#allocation2 + $0x98] sm:$0xf]
        %v2754 = vld [vmem:[#allocation2 + $0x9c] sm:$0xf]
        %v2755 = vld [vmem:[#allocation2 + $0xa0] sm:$0xf]
        %v2756 = vld [vmem:[#allocation2 + $0xa4] sm:$0xf]
        %v2757 = vld [vmem:[#allocation2 + $0xa8] sm:$0xf]
        %v2758 = vld [vmem:[#allocation2 + $0xac] sm:$0xf]
        %v2759 = vld [vmem:[#allocation2 + $0xb0] sm:$0xf]
        %v2760 = vld [vmem:[#allocation2 + $0xb4] sm:$0xf]
        %v2761 = vld [vmem:[#allocation2 + $0xb8] sm:$0xf]
        %v2762 = vld [vmem:[#allocation2 + $0xbc] sm:$0xf]
        %v2763 = vld [vmem:[%s4] sm:$0x1]
        %v2765 = vlaneseq
        %v2766 = vshrl.u32 %v2765, 7
        %v2767 = vsub.s32 0, %v2766
        %v2768 = vrot.slane %v2763, %v2767
        %v2794 = vunpack.c.l.b16 %v2691
        %v2795 = vunpack.c.l.b16 %v2692
        %v2796 = vunpack.c.l.b16 %v2693
        %v2797 = vunpack.c.l.b16 %v2694
        %v2798 = vunpack.c.l.b16 %v2695
        %v2799 = vunpack.c.l.b16 %v2696
        %v2800 = vunpack.c.l.b16 %v2697
        %v2801 = vunpack.c.l.b16 %v2698
        %v2802 = vunpack.c.l.b16 %v2699
        %v2803 = vunpack.c.l.b16 %v2700
        %v2804 = vunpack.c.l.b16 %v2701
        %v2805 = vunpack.c.l.b16 %v2702
        %v2806 = vunpack.c.l.b16 %v2703
        %v2807 = vunpack.c.l.b16 %v2704
        %v2808 = vunpack.c.l.b16 %v2705
        %v2809 = vunpack.c.l.b16 %v2706
        %v2810 = vunpack.c.l.b16 %v2707
        %v2811 = vunpack.c.l.b16 %v2708
        %v2812 = vunpack.c.l.b16 %v2709
        %v2813 = vunpack.c.l.b16 %v2710
        %v2814 = vunpack.c.l.b16 %v2711
        %v2815 = vunpack.c.l.b16 %v2712
        %v2816 = vunpack.c.l.b16 %v2713
        %v2817 = vunpack.c.l.b16 %v2714
        %vm2818 = vcmask 1041409
        %v2819 = vsel %vm2818, %v2797, %v2794
        %vm2820 = vcmask 1042434
        %v2821 = vsel %vm2820, %v2800, %v2819
        %vm2822 = vcmask 1043459
        %v2823 = vsel %vm2822, %v2803, %v2821
        %vm2824 = vcmask 1044484
        %v2825 = vsel %vm2824, %v2806, %v2823
        %vm2826 = vcmask 1045509
        %v2827 = vsel %vm2826, %v2809, %v2825
        %vm2828 = vcmask 1046534
        %v2829 = vsel %vm2828, %v2812, %v2827
        %vm2830 = vcmask 1047559
        %v2831 = vsel %vm2830, %v2815, %v2829
        %v2832 = vsel %vm2818, %v2798, %v2795
        %v2833 = vsel %vm2820, %v2801, %v2832
        %v2834 = vsel %vm2822, %v2804, %v2833
        %v2835 = vsel %vm2824, %v2807, %v2834
        %v2836 = vsel %vm2826, %v2810, %v2835
        %v2837 = vsel %vm2828, %v2813, %v2836
        %v2838 = vsel %vm2830, %v2816, %v2837
        %v2839 = vsel %vm2818, %v2799, %v2796
        %v2840 = vsel %vm2820, %v2802, %v2839
        %v2841 = vsel %vm2822, %v2805, %v2840
        %v2842 = vsel %vm2824, %v2808, %v2841
        %v2843 = vsel %vm2826, %v2811, %v2842
        %v2844 = vsel %vm2828, %v2814, %v2843
        %v2845 = vsel %vm2830, %v2817, %v2844
        %v2846 = vpack.c.b16 %v2831, %v2831
        %v2847 = vpack.c.b16 %v2838, %v2838
        %v2848 = vpack.c.b16 %v2845, %v2845
        %v2900 = vunpack.c.l.b16 %v2715
        %v2901 = vunpack.c.l.b16 %v2716
        %v2902 = vunpack.c.l.b16 %v2717
        %v2903 = vunpack.c.l.b16 %v2718
        %v2904 = vunpack.c.l.b16 %v2719
        %v2905 = vunpack.c.l.b16 %v2720
        %v2906 = vunpack.c.l.b16 %v2721
        %v2907 = vunpack.c.l.b16 %v2722
        %v2908 = vunpack.c.l.b16 %v2723
        %v2909 = vunpack.c.l.b16 %v2724
        %v2910 = vunpack.c.l.b16 %v2725
        %v2911 = vunpack.c.l.b16 %v2726
        %v2912 = vunpack.c.l.b16 %v2727
        %v2913 = vunpack.c.l.b16 %v2728
        %v2914 = vunpack.c.l.b16 %v2729
        %v2915 = vunpack.c.l.b16 %v2730
        %v2916 = vunpack.c.l.b16 %v2731
        %v2917 = vunpack.c.l.b16 %v2732
        %v2918 = vunpack.c.l.b16 %v2733
        %v2919 = vunpack.c.l.b16 %v2734
        %v2920 = vunpack.c.l.b16 %v2735
        %v2921 = vunpack.c.l.b16 %v2736
        %v2922 = vunpack.c.l.b16 %v2737
        %v2923 = vunpack.c.l.b16 %v2738
        %v2924 = vunpack.c.l.b16 %v2739
        %v2925 = vunpack.c.l.b16 %v2740
        %v2926 = vunpack.c.l.b16 %v2741
        %v2927 = vunpack.c.l.b16 %v2742
        %v2928 = vunpack.c.l.b16 %v2743
        %v2929 = vunpack.c.l.b16 %v2744
        %v2930 = vunpack.c.l.b16 %v2745
        %v2931 = vunpack.c.l.b16 %v2746
        %v2932 = vunpack.c.l.b16 %v2747
        %v2933 = vunpack.c.l.b16 %v2748
        %v2934 = vunpack.c.l.b16 %v2749
        %v2935 = vunpack.c.l.b16 %v2750
        %v2936 = vunpack.c.l.b16 %v2751
        %v2937 = vunpack.c.l.b16 %v2752
        %v2938 = vunpack.c.l.b16 %v2753
        %v2939 = vunpack.c.l.b16 %v2754
        %v2940 = vunpack.c.l.b16 %v2755
        %v2941 = vunpack.c.l.b16 %v2756
        %v2942 = vunpack.c.l.b16 %v2757
        %v2943 = vunpack.c.l.b16 %v2758
        %v2944 = vunpack.c.l.b16 %v2759
        %v2945 = vunpack.c.l.b16 %v2760
        %v2946 = vunpack.c.l.b16 %v2761
        %v2947 = vunpack.c.l.b16 %v2762
        %v2948 = vpack.c.b16 %v2901, %v2900
        %v2949 = vpack.c.b16 %v2903, %v2902
        %v2950 = vpack.c.b16 %v2905, %v2904
        %v2951 = vpack.c.b16 %v2907, %v2906
        %v2952 = vpack.c.b16 %v2909, %v2908
        %v2953 = vpack.c.b16 %v2911, %v2910
        %v2954 = vpack.c.b16 %v2913, %v2912
        %v2955 = vpack.c.b16 %v2915, %v2914
        %v2956 = vpack.c.b16 %v2917, %v2916
        %v2957 = vpack.c.b16 %v2919, %v2918
        %v2958 = vpack.c.b16 %v2921, %v2920
        %v2959 = vpack.c.b16 %v2923, %v2922
        %v2960 = vpack.c.b16 %v2925, %v2924
        %v2961 = vpack.c.b16 %v2927, %v2926
        %v2962 = vpack.c.b16 %v2929, %v2928
        %v2963 = vpack.c.b16 %v2931, %v2930
        %v2964 = vpack.c.b16 %v2933, %v2932
        %v2965 = vpack.c.b16 %v2935, %v2934
        %v2966 = vpack.c.b16 %v2937, %v2936
        %v2967 = vpack.c.b16 %v2939, %v2938
        %v2968 = vpack.c.b16 %v2941, %v2940
        %v2969 = vpack.c.b16 %v2943, %v2942
        %v2970 = vpack.c.b16 %v2945, %v2944
        %v2971 = vpack.c.b16 %v2947, %v2946
        %2996 = vmatprep.subr.bf16.mxu0 0
        %2997 = vmatpush1.bf16.msra.mxu0 %v2955
        %2998 = vmatprep.subr.bf16.mxu0 0
        %2999 = vmatpush1.bf16.msra.mxu0 %v2954
        %3000 = vmatprep.subr.bf16.mxu0 0
        %3001 = vmatpush1.bf16.msra.mxu0 %v2953
        %3002 = vmatprep.subr.bf16.mxu0 0
        %3003 = vmatpush1.bf16.msra.mxu0 %v2952
        %3004 = vmatprep.subr.bf16.mxu0 0
        %3005 = vmatpush1.bf16.msra.mxu0 %v2951
        %3006 = vmatprep.subr.bf16.mxu0 0
        %3007 = vmatpush1.bf16.msra.mxu0 %v2950
        %3008 = vmatprep.subr.bf16.mxu0 0
        %3009 = vmatpush1.bf16.msra.mxu0 %v2949
        %3010 = vmatprep.subr.bf16.mxu0 0
        %3011 = vmatpush1.bf16.msra.mxu0 %v2948
        %3012 = vmatprep.subr.bf16.mxu0 0
        %3013 = vmatpush2.bf16.msra.mxu0 %v2963
        %3014 = vmatprep.subr.bf16.mxu0 0
        %3015 = vmatpush2.bf16.msra.mxu0 %v2962
        %3016 = vmatprep.subr.bf16.mxu0 0
        %3017 = vmatpush2.bf16.msra.mxu0 %v2961
        %3018 = vmatprep.subr.bf16.mxu0 0
        %3019 = vmatpush2.bf16.msra.mxu0 %v2960
        %3020 = vmatprep.subr.bf16.mxu0 0
        %3021 = vmatpush2.bf16.msra.mxu0 %v2959
        %3022 = vmatprep.subr.bf16.mxu0 0
        %3023 = vmatpush2.bf16.msra.mxu0 %v2958
        %3024 = vmatprep.subr.bf16.mxu0 0
        %3025 = vmatpush2.bf16.msra.mxu0 %v2957
        %3026 = vmatprep.subr.bf16.mxu0 0
        %3027 = vmatpush2.bf16.msra.mxu0 %v2956
        %3028 = vmatprep.mubr.bf16.mxu0 %v2847
        %3029 = vmatmul.mubr.bf16.gmra.mxu0 %v2846
        %v3030 = vpop.f32.mrf.mxu0
        %v3031 = vadd.f32 %v2768, %v3030
        %v3032 = vpop.f32.mrf.mxu0
        %v3033 = vpop.f32.mrf.mxu0
        %v3034 = vpop.f32.mrf.mxu0
        %3035 = vdwg.mxu0
        %3036 = vmatprep.subr.bf16.mxu0 0
        %3037 = vmatpush1.bf16.msra.mxu0 %v2971
        %3038 = vmatprep.subr.bf16.mxu0 0
        %3039 = vmatpush1.bf16.msra.mxu0 %v2970
        %3040 = vmatprep.subr.bf16.mxu0 0
        %3041 = vmatpush1.bf16.msra.mxu0 %v2969
        %3042 = vmatprep.subr.bf16.mxu0 0
        %3043 = vmatpush1.bf16.msra.mxu0 %v2968
        %3044 = vmatprep.subr.bf16.mxu0 0
        %3045 = vmatpush1.bf16.msra.mxu0 %v2967
        %3046 = vmatprep.subr.bf16.mxu0 0
        %3047 = vmatpush1.bf16.msra.mxu0 %v2966
        %3048 = vmatprep.subr.bf16.mxu0 0
        %3049 = vmatpush1.bf16.msra.mxu0 %v2965
        %3050 = vmatprep.subr.bf16.mxu0 0
        %3051 = vmatpush1.bf16.msra.mxu0 %v2964
        %3052 = vmatprep.subr.bf16.mxu0 0
        %3053 = vmatpush2.bf16.msra.mxu0 0
        %3054 = vmatprep.subr.bf16.mxu0 0
        %3055 = vmatpush2.bf16.msra.mxu0 0
        %3056 = vmatprep.subr.bf16.mxu0 0
        %3057 = vmatpush2.bf16.msra.mxu0 0
        %3058 = vmatprep.subr.bf16.mxu0 0
        %3059 = vmatpush2.bf16.msra.mxu0 0
        %3060 = vmatprep.subr.bf16.mxu0 0
        %3061 = vmatpush2.bf16.msra.mxu0 0
        %3062 = vmatprep.subr.bf16.mxu0 0
        %3063 = vmatpush2.bf16.msra.mxu0 0
        %3064 = vmatprep.subr.bf16.mxu0 0
        %3065 = vmatpush2.bf16.msra.mxu0 0
        %3066 = vmatprep.subr.bf16.mxu0 0
        %3067 = vmatpush2.bf16.msra.mxu0 0
        %3068 = vmatprep.mubr.bf16.mxu0 0
        %3069 = vmatmul.mubr.bf16.gmra.mxu0 %v2848
        %v3070 = vpop.f32.mrf.mxu0
        %v3071 = vadd.f32 %v3031, %v3070
        %v3072 = vpop.f32.mrf.mxu0
        %v3073 = vpop.f32.mrf.mxu0
        %v3074 = vpop.f32.mrf.mxu0
        %3075 = vdwg.mxu0
        %v3076 = vmax.f32 %v3071, 0.0
        %v3077 = vpack.c.bf16 %v3076, %v3076
        %v3078 = vld [vmem:[%s5] sm:$0xf]
        %v3079 = vld [vmem:[%s5 + $0x4] sm:$0xf]
        %v3080 = vld [vmem:[%s5 + $0x8] sm:$0xf]
        %v3081 = vld [vmem:[%s5 + $0xc] sm:$0xf]
        %v3082 = vld [vmem:[%s5 + $0x10] sm:$0xf]
        %v3083 = vld [vmem:[%s5 + $0x14] sm:$0xf]
        %v3084 = vld [vmem:[%s5 + $0x18] sm:$0xf]
        %v3085 = vld [vmem:[%s5 + $0x1c] sm:$0xf]
        %v3086 = vld [vmem:[%s5 + $0x20] sm:$0xf]
        %v3087 = vld [vmem:[%s5 + $0x24] sm:$0xf]
        %v3088 = vld [vmem:[%s5 + $0x28] sm:$0xf]
        %v3089 = vld [vmem:[%s5 + $0x2c] sm:$0xf]
        %v3090 = vld [vmem:[%s5 + $0x30] sm:$0xf]
        %v3091 = vld [vmem:[%s5 + $0x34] sm:$0xf]
        %v3092 = vld [vmem:[%s5 + $0x38] sm:$0xf]
        %v3093 = vld [vmem:[%s5 + $0x3c] sm:$0xf]
        %v3094 = vld [vmem:[%s6] sm:$0x1]
        %v3096 = vlaneseq
        %v3097 = vshrl.u32 %v3096, 7
        %v3098 = vsub.s32 0, %v3097
        %v3099 = vrot.slane %v3094, %v3098
        %v3117 = vunpack.c.l.b16 %v3078
        %v3118 = vunpack.c.l.b16 %v3079
        %v3119 = vunpack.c.l.b16 %v3080
        %v3120 = vunpack.c.l.b16 %v3081
        %v3121 = vunpack.c.l.b16 %v3082
        %v3122 = vunpack.c.l.b16 %v3083
        %v3123 = vunpack.c.l.b16 %v3084
        %v3124 = vunpack.c.l.b16 %v3085
        %v3125 = vunpack.c.l.b16 %v3086
        %v3126 = vunpack.c.l.b16 %v3087
        %v3127 = vunpack.c.l.b16 %v3088
        %v3128 = vunpack.c.l.b16 %v3089
        %v3129 = vunpack.c.l.b16 %v3090
        %v3130 = vunpack.c.l.b16 %v3091
        %v3131 = vunpack.c.l.b16 %v3092
        %v3132 = vunpack.c.l.b16 %v3093
        %v3133 = vpack.c.b16 %v3118, %v3117
        %v3134 = vpack.c.b16 %v3120, %v3119
        %v3135 = vpack.c.b16 %v3122, %v3121
        %v3136 = vpack.c.b16 %v3124, %v3123
        %v3137 = vpack.c.b16 %v3126, %v3125
        %v3138 = vpack.c.b16 %v3128, %v3127
        %v3139 = vpack.c.b16 %v3130, %v3129
        %v3140 = vpack.c.b16 %v3132, %v3131
        %3149 = vmatprep.subr.bf16.mxu0 0
        %3150 = vmatpush1.bf16.msra.mxu0 %v3140
        %3151 = vmatprep.subr.bf16.mxu0 0
        %3152 = vmatpush1.bf16.msra.mxu0 %v3139
        %3153 = vmatprep.subr.bf16.mxu0 0
        %3154 = vmatpush1.bf16.msra.mxu0 %v3138
        %3155 = vmatprep.subr.bf16.mxu0 0
        %3156 = vmatpush1.bf16.msra.mxu0 %v3137
        %3157 = vmatprep.subr.bf16.mxu0 0
        %3158 = vmatpush1.bf16.msra.mxu0 %v3136
        %3159 = vmatprep.subr.bf16.mxu0 0
        %3160 = vmatpush1.bf16.msra.mxu0 %v3135
        %3161 = vmatprep.subr.bf16.mxu0 0
        %3162 = vmatpush1.bf16.msra.mxu0 %v3134
        %3163 = vmatprep.subr.bf16.mxu0 0
        %3164 = vmatpush1.bf16.msra.mxu0 %v3133
        %3165 = vmatprep.subr.bf16.mxu0 0
        %3166 = vmatpush2.bf16.msra.mxu0 0
        %3167 = vmatprep.subr.bf16.mxu0 0
        %3168 = vmatpush2.bf16.msra.mxu0 0
        %3169 = vmatprep.subr.bf16.mxu0 0
        %3170 = vmatpush2.bf16.msra.mxu0 0
        %3171 = vmatprep.subr.bf16.mxu0 0
        %3172 = vmatpush2.bf16.msra.mxu0 0
        %3173 = vmatprep.subr.bf16.mxu0 0
        %3174 = vmatpush2.bf16.msra.mxu0 0
        %3175 = vmatprep.subr.bf16.mxu0 0
        %3176 = vmatpush2.bf16.msra.mxu0 0
        %3177 = vmatprep.subr.bf16.mxu0 0
        %3178 = vmatpush2.bf16.msra.mxu0 0
        %3179 = vmatprep.subr.bf16.mxu0 0
        %3180 = vmatpush2.bf16.msra.mxu0 0
        %3181 = vmatprep.mubr.bf16.mxu0 0
        %3182 = vmatmul.mubr.bf16.gmra.mxu0 %v3077
        %v3183 = vpop.f32.mrf.mxu0
        %v3184 = vadd.f32 %v3099, %v3183
        %v3185 = vpop.f32.mrf.mxu0
        %v3186 = vpop.f32.mrf.mxu0
        %v3187 = vpop.f32.mrf.mxu0
        %3188 = vdwg.mxu0
        %3189 = vst [vmem:[%s289] sm:$0xff] %v3184
        %s3190 = sand.u32 %s182, 1
        %s3191 = scalar_lea.sflag [#allocation4], %s3190
        %s3192 = sand.u32 %s182, 1
        %s3193 = smul.addr %s3192, 8
        %s3194 = scalar_lea.vmem [#allocation5], %s3193
        // Predicated region
        $region53: #{tpu_custom_call.1} parent=47 // pred_check
          %p3195 = pneg %p192
        $region54: #{tpu_custom_call.1} parent=47 // pred_check_branch
          %3197 = sbr.rel (%p3195) target = $region56
        $region55: #{tpu_custom_call.1} parent=47 // pred_region
          %s3199 = ssub.s32 128, 128
          %3200 = vsyncadd %s3191, %s3199
          %s3201 = smul.addr %s22, 128
          %s3202 = scalar_lea.hbm %s7, %s3201
          %s3204 = sshll.u32 %s3194, 4
          %s3205 = int_to_ptr.vmem [resolvable:$true] %s3204
          %3207 = dma.vmem_to_hbm [thread:$0]  %s3205, 128, %s3202, %s3191
        $region56: #{tpu_custom_call.1} parent=47 // pred_fallthru
          _
      $region48: #{tpu_custom_call.1} parent=5 // pred_fallthru
        _
      %p3208 = scmp.le.s32.totalorder 2, %s17
      // Predicated region
      $region57: #{tpu_custom_call.1} parent=5 // pred_check
        %p3209 = pneg %p3208
      $region58: #{tpu_custom_call.1} parent=5 // pred_check_branch
        %3211 = sbr.rel (%p3209) target = $region60
      $region59: #{tpu_custom_call.1} parent=5 // pred_region
        %s3212 = ssub.s32 %s17, 2
        // Predicated region
        $region61: #{tpu_custom_call.1} parent=59 // pred_check
          %p3213 = pneg %p198
        $region62: #{tpu_custom_call.1} parent=59 // pred_check_branch
          %3215 = sbr.rel (%p3213) target = $region64
        $region63: #{tpu_custom_call.1} parent=59 // pred_region
          %s3216 = sand.u32 %s183, 1
          %s3217 = scalar_lea.sflag [#allocation4], %s3216
          %s3218 = sand.u32 %s183, 1
          %s3219 = smul.addr %s3218, 8
          %s3220 = scalar_lea.vmem [#allocation5], %s3219
          %3221 = dma.done %s3217, 128
        $region64: #{tpu_custom_call.1} parent=59 // pred_fallthru
          _
      $region60: #{tpu_custom_call.1} parent=5 // pred_fallthru
        _
    $region6: #{tpu_custom_call.1} parent=1 // loop_footer
      %s21 = sadd.s32 1, %s17
    $region7: #{tpu_custom_call.1} parent=1 // loop_footer_branch
      %16 = sbr.rel target = $region3
    $region8: #{tpu_custom_call.1} parent=1 // loop_exit
      _
    %3222 = vsyncpa [#allocation3], 1
    %s3223 = scalar_lea.sflag [#allocation3], 1
    %3224 = vsyncpa %s3223, 1
    %3225 = vsyncpa [#allocation4], 1
    %s3226 = scalar_lea.sflag [#allocation4], 1
    %3227 = vsyncpa %s3226, 1

</llo_original>
